<compile_context>
chip_gen: v7x
topology: tpu7x:2x2x1
jax: 0.10.0
libtpu: 0.0.40
codegen_flags: <defaults>
</compile_context>

<pallas_src>
import jax
import jax.numpy as jnp
from jax.experimental import pallas as pl
from jax.experimental.pallas import tpu as pltpu

D_IN = 4      # LayerNorm / model dim
D_HID = 16    # MLP hidden dim
LN_EPS = 1e-5
LANES = 128
CHUNK = 32        # sublane-groups per inner compute step (= 4096 rows)
MAX_CHUNKS = 8    # chunks per grid step -> up to 32768 rows per step


def make_block_kernel(sub, chunk):
    """Kernel over one [D_IN, sub, 128] feature-major tile, chunked on sublanes."""
    assert sub % chunk == 0
    n_chunks = sub // chunk

    def kernel(w1_ref, b1_ref, w2_ref, b2_ref, x_ref, o_ref):
        # w*/b* live in SMEM (scalars broadcast by the VPU); x/o tiles in VMEM.
        def chunk_body(c):
            r0 = c * chunk
            if not isinstance(r0, int):
                r0 = pl.multiple_of(r0, chunk)   # chunk is a multiple of 8 here
            xs = [x_ref[f, pl.ds(r0, chunk), :].astype(jnp.float32)
                  for f in range(D_IN)]

            # --- LayerNorm over the 4 features (weight folded into w1) ---
            mean = (xs[0] + xs[1] + xs[2] + xs[3]) * 0.25
            cs = [xv - mean for xv in xs]
            var = (cs[0] * cs[0] + cs[1] * cs[1]
                   + cs[2] * cs[2] + cs[3] * cs[3]) * 0.25
            inv = jax.lax.rsqrt(var + LN_EPS)
            ns = [cv * inv for cv in cs]

            # --- fc1 -> tanh-GELU (EUP) -> fc2, unrolled on the VPU ---
            # (K=4/16 is useless on the MXU; scalar weights come from SMEM.)
            ys = [None] * D_IN
            for j in range(D_HID):
                h = (ns[0] * w1_ref[0, j] + ns[1] * w1_ref[1, j]
                     + ns[2] * w1_ref[2, j] + ns[3] * w1_ref[3, j]
                     + b1_ref[j])
                h = jax.nn.gelu(h, approximate=True)   # tanh -> EUP slot
                for k in range(D_IN):
                    t = h * w2_ref[j, k]
                    ys[k] = t if ys[k] is None else ys[k] + t

            # Dense, unmasked lane-major stores; fc2 bias added once here.
            for k in range(D_IN):
                o_ref[k, pl.ds(r0, chunk), :] = (
                    ys[k] + b2_ref[k]).astype(o_ref.dtype)

        if n_chunks == 1:
            chunk_body(0)
        else:
            @pl.loop(0, n_chunks)
            def _(c):
                chunk_body(c)

    return kernel


def _choose_tiling(r128):
    """Pick (sub, chunk, n_tiles) for r128 groups of 128 rows."""
    if r128 <= CHUNK:
        # Single tile covering the whole (padded) array; block == full extent.
        return r128, r128, 1
    n_chunks = -(-r128 // CHUNK)
    chunks_per_tile = min(n_chunks, MAX_CHUNKS)
    n_tiles = -(-n_chunks // chunks_per_tile)
    if n_tiles == 1:
        # Give both TensorCores work on megacore parts (v7x).
        n_tiles = 2
        chunks_per_tile = -(-n_chunks // 2)
    return chunks_per_tile * CHUNK, CHUNK, n_tiles


def _block_call(x_t, w1_eff, b1, w2, b2, *, sub, chunk, n_tiles):
    smem = pl.BlockSpec(memory_space=pltpu.MemorySpace.SMEM)
    act_spec = pl.BlockSpec((D_IN, sub, LANES), lambda i: (0, i, 0))
    return pl.pallas_call(
        make_block_kernel(sub, chunk),
        out_shape=jax.ShapeDtypeStruct(x_t.shape, x_t.dtype),
        grid=(n_tiles,),
        in_specs=[smem, smem, smem, smem, act_spec],
        out_specs=act_spec,
        # Default double-buffering is enough: per-step DMA is fully hidden
        # under the VALU/EUP work, so no deeper pipelining is requested.
        # TODO(synk): on v7x, switch to pltpu.CORE_PARALLEL (or pl.core_map
        # over create_tensorcore_mesh) if profiling shows the row grid pinned
        # on one TensorCore; "parallel" + n_tiles>=2 is the portable default.
        compiler_params=pltpu.CompilerParams(
            dimension_semantics=("parallel",)),
    )(w1_eff, b1, w2, b2, x_t)


def _fold_params(params):
    ln_w, w1, b1, w2, b2 = params
    # Fold LN weight into fc1: (xn * ln_w) @ W1 == xn @ (diag(ln_w) @ W1).
    # Weights are kept f32 (read as scalars from SMEM inside the kernel).
    w1_eff = ln_w[:, None].astype(jnp.float32) * w1.astype(jnp.float32)
    return (w1_eff, b1.astype(jnp.float32), w2.astype(jnp.float32),
            b2.astype(jnp.float32))


def block_forward(x, params):
    """x: [..., D_IN] (f32 or bf16). Returns same shape/dtype; math in f32."""
    w1_eff, b1, w2, b2 = _fold_params(params)
    orig_shape = x.shape
    rows = x.reshape(-1, D_IN)
    R = rows.shape[0]
    r128 = max(-(-R // LANES), 1)
    sub, chunk, n_tiles = _choose_tiling(r128)
    r128_pad = n_tiles * sub
    R_pad = r128_pad * LANES
    if R_pad != R:
        rows = jnp.pad(rows, ((0, R_pad - R), (0, 0)))
    # TODO(synk): keep activations feature-major ([D_IN, R]) across the
    # surrounding graph (use block_forward_feature_major) so these two
    # host-side HBM transposes disappear.
    x_t = rows.T.reshape(D_IN, r128_pad, LANES)
    out_t = _block_call(x_t, w1_eff, b1, w2, b2,
                        sub=sub, chunk=chunk, n_tiles=n_tiles)
    y = out_t.reshape(D_IN, R_pad).T[:R]
    return y.reshape(orig_shape)


def block_forward_feature_major(x_fm, params):
    """x_fm: [D_IN, R] feature-major. Returns [D_IN, R]; no host transposes."""
    w1_eff, b1, w2, b2 = _fold_params(params)
    R = x_fm.shape[1]
    r128 = max(-(-R // LANES), 1)
    sub, chunk, n_tiles = _choose_tiling(r128)
    R_pad = n_tiles * sub * LANES
    if R_pad != R:
        x_fm = jnp.pad(x_fm, ((0, 0), (0, R_pad - R)))
    x_t = x_fm.reshape(D_IN, n_tiles * sub, LANES)
    out_t = _block_call(x_t, w1_eff, b1, w2, b2,
                        sub=sub, chunk=chunk, n_tiles=n_tiles)
    return out_t.reshape(D_IN, R_pad)[:, :R]


def init_params(key):
    k1, k2, k3, k4 = jax.random.split(key, 4)
    ln_w = jnp.ones((D_IN,), jnp.float32)                      # PyTorch LN init
    w1 = jax.random.normal(k1, (D_IN, D_HID), jnp.float32) * 0.1   # [in, out]
    b1 = jax.random.normal(k2, (D_HID,), jnp.float32) * 0.01
    w2 = jax.random.normal(k3, (D_HID, D_IN), jnp.float32) * 0.1   # [in, out]
    b2 = jax.random.normal(k4, (D_IN,), jnp.float32) * 0.01
    return (ln_w, w1, b1, w2, b2)


def block_reference(x, params, approximate=True):
    """Plain-JAX reference (approximate=False == torch.nn.GELU() default)."""
    ln_w, w1, b1, w2, b2 = params
    mean = jnp.mean(x, axis=-1, keepdims=True)
    var = jnp.mean((x - mean) ** 2, axis=-1, keepdims=True)
    xn = (x - mean) * jax.lax.rsqrt(var + LN_EPS) * ln_w
    h = jax.nn.gelu(xn @ w1 + b1, approximate=approximate)
    return h @ w2 + b2


if __name__ == "__main__":
    key = jax.random.PRNGKey(0)
    kx, kx2, kp = jax.random.split(key, 3)
    params = init_params(kp)

    # Small shape consistent with the module: batch=2, seq=8, features=4.
    x = jax.random.normal(kx, (2, 8, D_IN), jnp.float32)
    y = jax.block_until_ready(block_forward(x, params))
    assert y.shape == x.shape
    # Exact parity with the tanh-GELU reference.
    assert jnp.allclose(y, block_reference(x, params, approximate=True),
                        atol=1e-5, rtol=1e-5)
    # torch.nn.GELU() default (exact erf) parity within the ~1e-3 tanh error.
    assert jnp.allclose(y, block_reference(x, params, approximate=False),
                        atol=5e-3, rtol=0.0)

    # Exercise the multi-tile / inner-chunk-loop path (padding + pl.loop).
    x2 = jax.random.normal(kx2, (65, 128, D_IN), jnp.float32)
    y2 = jax.block_until_ready(block_forward(x2, params))
    assert y2.shape == x2.shape
    assert jnp.allclose(y2, block_reference(x2, params, approximate=True),
                        atol=1e-5, rtol=1e-5)

    # Feature-major entry point (no host-side transposes) agrees as well.
    y_fm = jax.block_until_ready(
        block_forward_feature_major(x.reshape(-1, D_IN).T, params))
    assert jnp.allclose(y_fm.T.reshape(x.shape), y, atol=1e-6, rtol=1e-6)

    print("KERNEL_OK")
</pallas_src>

<mosaic_0001>
module attributes {stable_mosaic.version = 11 : i64} {
  func.func @kernel(%arg0: i32, %arg1: memref<4x16xf32, #tpu.memory_space<smem>>, %arg2: memref<16xf32, #tpu.memory_space<smem>>, %arg3: memref<16x4xf32, #tpu.memory_space<smem>>, %arg4: memref<4xf32, #tpu.memory_space<smem>>, %arg5: memref<4x1x128xf32, #tpu.memory_space<vmem>>, %arg6: memref<4x1x128xf32, #tpu.memory_space<vmem>>) attributes {dimension_semantics = [#tpu.dimension_semantics<parallel>], iteration_bounds = array<i64: 1>, scalar_prefetch = 0 : i64, scratch_operands = 0 : i64, tpu.core_type = #tpu.core_type<tc>, window_params = [{transform_indices = @transform_0, window_bounds = array<i64: 4, 16>}, {transform_indices = @transform_1, window_bounds = array<i64: 16>}, {transform_indices = @transform_2, window_bounds = array<i64: 16, 4>}, {transform_indices = @transform_3, window_bounds = array<i64: 4>}, {transform_indices = @transform_4, window_bounds = array<i64: 4, 1, 128>}, {transform_indices = @transform_5, window_bounds = array<i64: 4, 1, 128>}]} {
    %c0 = arith.constant 0 : index
    %c0_0 = arith.constant 0 : index
    %c0_1 = arith.constant 0 : index
    %0 = vector.load %arg5[%c0, %c0_0, %c0_1] : memref<4x1x128xf32, #tpu.memory_space<vmem>>, vector<1x1x128xf32>
    %1 = vector.shape_cast %0 : vector<1x1x128xf32> to vector<1x128xf32>
    %c1 = arith.constant 1 : index
    %c0_2 = arith.constant 0 : index
    %c0_3 = arith.constant 0 : index
    %2 = vector.load %arg5[%c1, %c0_2, %c0_3] : memref<4x1x128xf32, #tpu.memory_space<vmem>>, vector<1x1x128xf32>
    %3 = vector.shape_cast %2 : vector<1x1x128xf32> to vector<1x128xf32>
    %c2 = arith.constant 2 : index
    %c0_4 = arith.constant 0 : index
    %c0_5 = arith.constant 0 : index
    %4 = vector.load %arg5[%c2, %c0_4, %c0_5] : memref<4x1x128xf32, #tpu.memory_space<vmem>>, vector<1x1x128xf32>
    %5 = vector.shape_cast %4 : vector<1x1x128xf32> to vector<1x128xf32>
    %c3 = arith.constant 3 : index
    %c0_6 = arith.constant 0 : index
    %c0_7 = arith.constant 0 : index
    %6 = vector.load %arg5[%c3, %c0_6, %c0_7] : memref<4x1x128xf32, #tpu.memory_space<vmem>>, vector<1x1x128xf32>
    %7 = vector.shape_cast %6 : vector<1x1x128xf32> to vector<1x128xf32>
    %8 = arith.addf %1, %3 : vector<1x128xf32>
    %9 = arith.addf %8, %5 : vector<1x128xf32>
    %10 = arith.addf %9, %7 : vector<1x128xf32>
    %cst = arith.constant 2.500000e-01 : f32
    %11 = vector.broadcast %cst : f32 to vector<1x128xf32>
    %12 = arith.mulf %10, %11 : vector<1x128xf32>
    %13 = arith.subf %1, %12 : vector<1x128xf32>
    %14 = arith.subf %3, %12 : vector<1x128xf32>
    %15 = arith.subf %5, %12 : vector<1x128xf32>
    %16 = arith.subf %7, %12 : vector<1x128xf32>
    %17 = arith.mulf %13, %13 : vector<1x128xf32>
    %18 = arith.mulf %14, %14 : vector<1x128xf32>
    %19 = arith.addf %17, %18 : vector<1x128xf32>
    %20 = arith.mulf %15, %15 : vector<1x128xf32>
    %21 = arith.addf %19, %20 : vector<1x128xf32>
    %22 = arith.mulf %16, %16 : vector<1x128xf32>
    %23 = arith.addf %21, %22 : vector<1x128xf32>
    %cst_8 = arith.constant 2.500000e-01 : f32
    %24 = vector.broadcast %cst_8 : f32 to vector<1x128xf32>
    %25 = arith.mulf %23, %24 : vector<1x128xf32>
    %cst_9 = arith.constant 9.99999974E-6 : f32
    %26 = vector.broadcast %cst_9 : f32 to vector<1x128xf32>
    %27 = arith.addf %25, %26 : vector<1x128xf32>
    %28 = math.rsqrt %27 : vector<1x128xf32>
    %29 = arith.mulf %13, %28 : vector<1x128xf32>
    %30 = arith.mulf %14, %28 : vector<1x128xf32>
    %31 = arith.mulf %15, %28 : vector<1x128xf32>
    %32 = arith.mulf %16, %28 : vector<1x128xf32>
    %c0_10 = arith.constant 0 : index
    %c0_11 = arith.constant 0 : index
    %33 = memref.load %arg1[%c0_10, %c0_11] : memref<4x16xf32, #tpu.memory_space<smem>>
    %34 = vector.broadcast %33 : f32 to vector<1x128xf32>
    %35 = arith.mulf %29, %34 : vector<1x128xf32>
    %c1_12 = arith.constant 1 : index
    %c0_13 = arith.constant 0 : index
    %36 = memref.load %arg1[%c1_12, %c0_13] : memref<4x16xf32, #tpu.memory_space<smem>>
    %37 = vector.broadcast %36 : f32 to vector<1x128xf32>
    %38 = arith.mulf %30, %37 : vector<1x128xf32>
    %39 = arith.addf %35, %38 : vector<1x128xf32>
    %c2_14 = arith.constant 2 : index
    %c0_15 = arith.constant 0 : index
    %40 = memref.load %arg1[%c2_14, %c0_15] : memref<4x16xf32, #tpu.memory_space<smem>>
    %41 = vector.broadcast %40 : f32 to vector<1x128xf32>
    %42 = arith.mulf %31, %41 : vector<1x128xf32>
    %43 = arith.addf %39, %42 : vector<1x128xf32>
    %c3_16 = arith.constant 3 : index
    %c0_17 = arith.constant 0 : index
    %44 = memref.load %arg1[%c3_16, %c0_17] : memref<4x16xf32, #tpu.memory_space<smem>>
    %45 = vector.broadcast %44 : f32 to vector<1x128xf32>
    %46 = arith.mulf %32, %45 : vector<1x128xf32>
    %47 = arith.addf %43, %46 : vector<1x128xf32>
    %c0_18 = arith.constant 0 : index
    %48 = memref.load %arg2[%c0_18] : memref<16xf32, #tpu.memory_space<smem>>
    %49 = vector.broadcast %48 : f32 to vector<1x128xf32>
    %50 = arith.addf %47, %49 : vector<1x128xf32>
    %51 = arith.mulf %50, %50 : vector<1x128xf32>
    %52 = arith.mulf %50, %51 : vector<1x128xf32>
    %cst_19 = arith.constant 4.471500e-02 : f32
    %53 = vector.broadcast %cst_19 : f32 to vector<1x128xf32>
    %54 = arith.mulf %53, %52 : vector<1x128xf32>
    %55 = arith.addf %50, %54 : vector<1x128xf32>
    %cst_20 = arith.constant 0.797884583 : f32
    %56 = vector.broadcast %cst_20 : f32 to vector<1x128xf32>
    %57 = arith.mulf %56, %55 : vector<1x128xf32>
    %58 = math.tanh %57 : vector<1x128xf32>
    %cst_21 = arith.constant 1.000000e+00 : f32
    %59 = vector.broadcast %cst_21 : f32 to vector<1x128xf32>
    %60 = arith.addf %59, %58 : vector<1x128xf32>
    %cst_22 = arith.constant 5.000000e-01 : f32
    %61 = vector.broadcast %cst_22 : f32 to vector<1x128xf32>
    %62 = arith.mulf %61, %60 : vector<1x128xf32>
    %63 = arith.mulf %50, %62 : vector<1x128xf32>
    %c0_23 = arith.constant 0 : index
    %c0_24 = arith.constant 0 : index
    %64 = memref.load %arg3[%c0_23, %c0_24] : memref<16x4xf32, #tpu.memory_space<smem>>
    %65 = vector.broadcast %64 : f32 to vector<1x128xf32>
    %66 = arith.mulf %63, %65 : vector<1x128xf32>
    %c0_25 = arith.constant 0 : index
    %c1_26 = arith.constant 1 : index
    %67 = memref.load %arg3[%c0_25, %c1_26] : memref<16x4xf32, #tpu.memory_space<smem>>
    %68 = vector.broadcast %67 : f32 to vector<1x128xf32>
    %69 = arith.mulf %63, %68 : vector<1x128xf32>
    %c0_27 = arith.constant 0 : index
    %c2_28 = arith.constant 2 : index
    %70 = memref.load %arg3[%c0_27, %c2_28] : memref<16x4xf32, #tpu.memory_space<smem>>
    %71 = vector.broadcast %70 : f32 to vector<1x128xf32>
    %72 = arith.mulf %63, %71 : vector<1x128xf32>
    %c0_29 = arith.constant 0 : index
    %c3_30 = arith.constant 3 : index
    %73 = memref.load %arg3[%c0_29, %c3_30] : memref<16x4xf32, #tpu.memory_space<smem>>
    %74 = vector.broadcast %73 : f32 to vector<1x128xf32>
    %75 = arith.mulf %63, %74 : vector<1x128xf32>
    %c0_31 = arith.constant 0 : index
    %c1_32 = arith.constant 1 : index
    %76 = memref.load %arg1[%c0_31, %c1_32] : memref<4x16xf32, #tpu.memory_space<smem>>
    %77 = vector.broadcast %76 : f32 to vector<1x128xf32>
    %78 = arith.mulf %29, %77 : vector<1x128xf32>
    %c1_33 = arith.constant 1 : index
    %c1_34 = arith.constant 1 : index
    %79 = memref.load %arg1[%c1_33, %c1_34] : memref<4x16xf32, #tpu.memory_space<smem>>
    %80 = vector.broadcast %79 : f32 to vector<1x128xf32>
    %81 = arith.mulf %30, %80 : vector<1x128xf32>
    %82 = arith.addf %78, %81 : vector<1x128xf32>
    %c2_35 = arith.constant 2 : index
    %c1_36 = arith.constant 1 : index
    %83 = memref.load %arg1[%c2_35, %c1_36] : memref<4x16xf32, #tpu.memory_space<smem>>
    %84 = vector.broadcast %83 : f32 to vector<1x128xf32>
    %85 = arith.mulf %31, %84 : vector<1x128xf32>
    %86 = arith.addf %82, %85 : vector<1x128xf32>
    %c3_37 = arith.constant 3 : index
    %c1_38 = arith.constant 1 : index
    %87 = memref.load %arg1[%c3_37, %c1_38] : memref<4x16xf32, #tpu.memory_space<smem>>
    %88 = vector.broadcast %87 : f32 to vector<1x128xf32>
    %89 = arith.mulf %32, %88 : vector<1x128xf32>
    %90 = arith.addf %86, %89 : vector<1x128xf32>
    %c1_39 = arith.constant 1 : index
    %91 = memref.load %arg2[%c1_39] : memref<16xf32, #tpu.memory_space<smem>>
    %92 = vector.broadcast %91 : f32 to vector<1x128xf32>
    %93 = arith.addf %90, %92 : vector<1x128xf32>
    %94 = arith.mulf %93, %93 : vector<1x128xf32>
    %95 = arith.mulf %93, %94 : vector<1x128xf32>
    %cst_40 = arith.constant 4.471500e-02 : f32
    %96 = vector.broadcast %cst_40 : f32 to vector<1x128xf32>
    %97 = arith.mulf %96, %95 : vector<1x128xf32>
    %98 = arith.addf %93, %97 : vector<1x128xf32>
    %cst_41 = arith.constant 0.797884583 : f32
    %99 = vector.broadcast %cst_41 : f32 to vector<1x128xf32>
    %100 = arith.mulf %99, %98 : vector<1x128xf32>
    %101 = math.tanh %100 : vector<1x128xf32>
    %cst_42 = arith.constant 1.000000e+00 : f32
    %102 = vector.broadcast %cst_42 : f32 to vector<1x128xf32>
    %103 = arith.addf %102, %101 : vector<1x128xf32>
    %cst_43 = arith.constant 5.000000e-01 : f32
    %104 = vector.broadcast %cst_43 : f32 to vector<1x128xf32>
    %105 = arith.mulf %104, %103 : vector<1x128xf32>
    %106 = arith.mulf %93, %105 : vector<1x128xf32>
    %c1_44 = arith.constant 1 : index
    %c0_45 = arith.constant 0 : index
    %107 = memref.load %arg3[%c1_44, %c0_45] : memref<16x4xf32, #tpu.memory_space<smem>>
    %108 = vector.broadcast %107 : f32 to vector<1x128xf32>
    %109 = arith.mulf %106, %108 : vector<1x128xf32>
    %110 = arith.addf %66, %109 : vector<1x128xf32>
    %c1_46 = arith.constant 1 : index
    %c1_47 = arith.constant 1 : index
    %111 = memref.load %arg3[%c1_46, %c1_47] : memref<16x4xf32, #tpu.memory_space<smem>>
    %112 = vector.broadcast %111 : f32 to vector<1x128xf32>
    %113 = arith.mulf %106, %112 : vector<1x128xf32>
    %114 = arith.addf %69, %113 : vector<1x128xf32>
    %c1_48 = arith.constant 1 : index
    %c2_49 = arith.constant 2 : index
    %115 = memref.load %arg3[%c1_48, %c2_49] : memref<16x4xf32, #tpu.memory_space<smem>>
    %116 = vector.broadcast %115 : f32 to vector<1x128xf32>
    %117 = arith.mulf %106, %116 : vector<1x128xf32>
    %118 = arith.addf %72, %117 : vector<1x128xf32>
    %c1_50 = arith.constant 1 : index
    %c3_51 = arith.constant 3 : index
    %119 = memref.load %arg3[%c1_50, %c3_51] : memref<16x4xf32, #tpu.memory_space<smem>>
    %120 = vector.broadcast %119 : f32 to vector<1x128xf32>
    %121 = arith.mulf %106, %120 : vector<1x128xf32>
    %122 = arith.addf %75, %121 : vector<1x128xf32>
    %c0_52 = arith.constant 0 : index
    %c2_53 = arith.constant 2 : index
    %123 = memref.load %arg1[%c0_52, %c2_53] : memref<4x16xf32, #tpu.memory_space<smem>>
    %124 = vector.broadcast %123 : f32 to vector<1x128xf32>
    %125 = arith.mulf %29, %124 : vector<1x128xf32>
    %c1_54 = arith.constant 1 : index
    %c2_55 = arith.constant 2 : index
    %126 = memref.load %arg1[%c1_54, %c2_55] : memref<4x16xf32, #tpu.memory_space<smem>>
    %127 = vector.broadcast %126 : f32 to vector<1x128xf32>
    %128 = arith.mulf %30, %127 : vector<1x128xf32>
    %129 = arith.addf %125, %128 : vector<1x128xf32>
    %c2_56 = arith.constant 2 : index
    %c2_57 = arith.constant 2 : index
    %130 = memref.load %arg1[%c2_56, %c2_57] : memref<4x16xf32, #tpu.memory_space<smem>>
    %131 = vector.broadcast %130 : f32 to vector<1x128xf32>
    %132 = arith.mulf %31, %131 : vector<1x128xf32>
    %133 = arith.addf %129, %132 : vector<1x128xf32>
    %c3_58 = arith.constant 3 : index
    %c2_59 = arith.constant 2 : index
    %134 = memref.load %arg1[%c3_58, %c2_59] : memref<4x16xf32, #tpu.memory_space<smem>>
    %135 = vector.broadcast %134 : f32 to vector<1x128xf32>
    %136 = arith.mulf %32, %135 : vector<1x128xf32>
    %137 = arith.addf %133, %136 : vector<1x128xf32>
    %c2_60 = arith.constant 2 : index
    %138 = memref.load %arg2[%c2_60] : memref<16xf32, #tpu.memory_space<smem>>
    %139 = vector.broadcast %138 : f32 to vector<1x128xf32>
    %140 = arith.addf %137, %139 : vector<1x128xf32>
    %141 = arith.mulf %140, %140 : vector<1x128xf32>
    %142 = arith.mulf %140, %141 : vector<1x128xf32>
    %cst_61 = arith.constant 4.471500e-02 : f32
    %143 = vector.broadcast %cst_61 : f32 to vector<1x128xf32>
    %144 = arith.mulf %143, %142 : vector<1x128xf32>
    %145 = arith.addf %140, %144 : vector<1x128xf32>
    %cst_62 = arith.constant 0.797884583 : f32
    %146 = vector.broadcast %cst_62 : f32 to vector<1x128xf32>
    %147 = arith.mulf %146, %145 : vector<1x128xf32>
    %148 = math.tanh %147 : vector<1x128xf32>
    %cst_63 = arith.constant 1.000000e+00 : f32
    %149 = vector.broadcast %cst_63 : f32 to vector<1x128xf32>
    %150 = arith.addf %149, %148 : vector<1x128xf32>
    %cst_64 = arith.constant 5.000000e-01 : f32
    %151 = vector.broadcast %cst_64 : f32 to vector<1x128xf32>
    %152 = arith.mulf %151, %150 : vector<1x128xf32>
    %153 = arith.mulf %140, %152 : vector<1x128xf32>
    %c2_65 = arith.constant 2 : index
    %c0_66 = arith.constant 0 : index
    %154 = memref.load %arg3[%c2_65, %c0_66] : memref<16x4xf32, #tpu.memory_space<smem>>
    %155 = vector.broadcast %154 : f32 to vector<1x128xf32>
    %156 = arith.mulf %153, %155 : vector<1x128xf32>
    %157 = arith.addf %110, %156 : vector<1x128xf32>
    %c2_67 = arith.constant 2 : index
    %c1_68 = arith.constant 1 : index
    %158 = memref.load %arg3[%c2_67, %c1_68] : memref<16x4xf32, #tpu.memory_space<smem>>
    %159 = vector.broadcast %158 : f32 to vector<1x128xf32>
    %160 = arith.mulf %153, %159 : vector<1x128xf32>
    %161 = arith.addf %114, %160 : vector<1x128xf32>
    %c2_69 = arith.constant 2 : index
    %c2_70 = arith.constant 2 : index
    %162 = memref.load %arg3[%c2_69, %c2_70] : memref<16x4xf32, #tpu.memory_space<smem>>
    %163 = vector.broadcast %162 : f32 to vector<1x128xf32>
    %164 = arith.mulf %153, %163 : vector<1x128xf32>
    %165 = arith.addf %118, %164 : vector<1x128xf32>
    %c2_71 = arith.constant 2 : index
    %c3_72 = arith.constant 3 : index
    %166 = memref.load %arg3[%c2_71, %c3_72] : memref<16x4xf32, #tpu.memory_space<smem>>
    %167 = vector.broadcast %166 : f32 to vector<1x128xf32>
    %168 = arith.mulf %153, %167 : vector<1x128xf32>
    %169 = arith.addf %122, %168 : vector<1x128xf32>
    %c0_73 = arith.constant 0 : index
    %c3_74 = arith.constant 3 : index
    %170 = memref.load %arg1[%c0_73, %c3_74] : memref<4x16xf32, #tpu.memory_space<smem>>
    %171 = vector.broadcast %170 : f32 to vector<1x128xf32>
    %172 = arith.mulf %29, %171 : vector<1x128xf32>
    %c1_75 = arith.constant 1 : index
    %c3_76 = arith.constant 3 : index
    %173 = memref.load %arg1[%c1_75, %c3_76] : memref<4x16xf32, #tpu.memory_space<smem>>
    %174 = vector.broadcast %173 : f32 to vector<1x128xf32>
    %175 = arith.mulf %30, %174 : vector<1x128xf32>
    %176 = arith.addf %172, %175 : vector<1x128xf32>
    %c2_77 = arith.constant 2 : index
    %c3_78 = arith.constant 3 : index
    %177 = memref.load %arg1[%c2_77, %c3_78] : memref<4x16xf32, #tpu.memory_space<smem>>
    %178 = vector.broadcast %177 : f32 to vector<1x128xf32>
    %179 = arith.mulf %31, %178 : vector<1x128xf32>
    %180 = arith.addf %176, %179 : vector<1x128xf32>
    %c3_79 = arith.constant 3 : index
    %c3_80 = arith.constant 3 : index
    %181 = memref.load %arg1[%c3_79, %c3_80] : memref<4x16xf32, #tpu.memory_space<smem>>
    %182 = vector.broadcast %181 : f32 to vector<1x128xf32>
    %183 = arith.mulf %32, %182 : vector<1x128xf32>
    %184 = arith.addf %180, %183 : vector<1x128xf32>
    %c3_81 = arith.constant 3 : index
    %185 = memref.load %arg2[%c3_81] : memref<16xf32, #tpu.memory_space<smem>>
    %186 = vector.broadcast %185 : f32 to vector<1x128xf32>
    %187 = arith.addf %184, %186 : vector<1x128xf32>
    %188 = arith.mulf %187, %187 : vector<1x128xf32>
    %189 = arith.mulf %187, %188 : vector<1x128xf32>
    %cst_82 = arith.constant 4.471500e-02 : f32
    %190 = vector.broadcast %cst_82 : f32 to vector<1x128xf32>
    %191 = arith.mulf %190, %189 : vector<1x128xf32>
    %192 = arith.addf %187, %191 : vector<1x128xf32>
    %cst_83 = arith.constant 0.797884583 : f32
    %193 = vector.broadcast %cst_83 : f32 to vector<1x128xf32>
    %194 = arith.mulf %193, %192 : vector<1x128xf32>
    %195 = math.tanh %194 : vector<1x128xf32>
    %cst_84 = arith.constant 1.000000e+00 : f32
    %196 = vector.broadcast %cst_84 : f32 to vector<1x128xf32>
    %197 = arith.addf %196, %195 : vector<1x128xf32>
    %cst_85 = arith.constant 5.000000e-01 : f32
    %198 = vector.broadcast %cst_85 : f32 to vector<1x128xf32>
    %199 = arith.mulf %198, %197 : vector<1x128xf32>
    %200 = arith.mulf %187, %199 : vector<1x128xf32>
    %c3_86 = arith.constant 3 : index
    %c0_87 = arith.constant 0 : index
    %201 = memref.load %arg3[%c3_86, %c0_87] : memref<16x4xf32, #tpu.memory_space<smem>>
    %202 = vector.broadcast %201 : f32 to vector<1x128xf32>
    %203 = arith.mulf %200, %202 : vector<1x128xf32>
    %204 = arith.addf %157, %203 : vector<1x128xf32>
    %c3_88 = arith.constant 3 : index
    %c1_89 = arith.constant 1 : index
    %205 = memref.load %arg3[%c3_88, %c1_89] : memref<16x4xf32, #tpu.memory_space<smem>>
    %206 = vector.broadcast %205 : f32 to vector<1x128xf32>
    %207 = arith.mulf %200, %206 : vector<1x128xf32>
    %208 = arith.addf %161, %207 : vector<1x128xf32>
    %c3_90 = arith.constant 3 : index
    %c2_91 = arith.constant 2 : index
    %209 = memref.load %arg3[%c3_90, %c2_91] : memref<16x4xf32, #tpu.memory_space<smem>>
    %210 = vector.broadcast %209 : f32 to vector<1x128xf32>
    %211 = arith.mulf %200, %210 : vector<1x128xf32>
    %212 = arith.addf %165, %211 : vector<1x128xf32>
    %c3_92 = arith.constant 3 : index
    %c3_93 = arith.constant 3 : index
    %213 = memref.load %arg3[%c3_92, %c3_93] : memref<16x4xf32, #tpu.memory_space<smem>>
    %214 = vector.broadcast %213 : f32 to vector<1x128xf32>
    %215 = arith.mulf %200, %214 : vector<1x128xf32>
    %216 = arith.addf %169, %215 : vector<1x128xf32>
    %c0_94 = arith.constant 0 : index
    %c4 = arith.constant 4 : index
    %217 = memref.load %arg1[%c0_94, %c4] : memref<4x16xf32, #tpu.memory_space<smem>>
    %218 = vector.broadcast %217 : f32 to vector<1x128xf32>
    %219 = arith.mulf %29, %218 : vector<1x128xf32>
    %c1_95 = arith.constant 1 : index
    %c4_96 = arith.constant 4 : index
    %220 = memref.load %arg1[%c1_95, %c4_96] : memref<4x16xf32, #tpu.memory_space<smem>>
    %221 = vector.broadcast %220 : f32 to vector<1x128xf32>
    %222 = arith.mulf %30, %221 : vector<1x128xf32>
    %223 = arith.addf %219, %222 : vector<1x128xf32>
    %c2_97 = arith.constant 2 : index
    %c4_98 = arith.constant 4 : index
    %224 = memref.load %arg1[%c2_97, %c4_98] : memref<4x16xf32, #tpu.memory_space<smem>>
    %225 = vector.broadcast %224 : f32 to vector<1x128xf32>
    %226 = arith.mulf %31, %225 : vector<1x128xf32>
    %227 = arith.addf %223, %226 : vector<1x128xf32>
    %c3_99 = arith.constant 3 : index
    %c4_100 = arith.constant 4 : index
    %228 = memref.load %arg1[%c3_99, %c4_100] : memref<4x16xf32, #tpu.memory_space<smem>>
    %229 = vector.broadcast %228 : f32 to vector<1x128xf32>
    %230 = arith.mulf %32, %229 : vector<1x128xf32>
    %231 = arith.addf %227, %230 : vector<1x128xf32>
    %c4_101 = arith.constant 4 : index
    %232 = memref.load %arg2[%c4_101] : memref<16xf32, #tpu.memory_space<smem>>
    %233 = vector.broadcast %232 : f32 to vector<1x128xf32>
    %234 = arith.addf %231, %233 : vector<1x128xf32>
    %235 = arith.mulf %234, %234 : vector<1x128xf32>
    %236 = arith.mulf %234, %235 : vector<1x128xf32>
    %cst_102 = arith.constant 4.471500e-02 : f32
    %237 = vector.broadcast %cst_102 : f32 to vector<1x128xf32>
    %238 = arith.mulf %237, %236 : vector<1x128xf32>
    %239 = arith.addf %234, %238 : vector<1x128xf32>
    %cst_103 = arith.constant 0.797884583 : f32
    %240 = vector.broadcast %cst_103 : f32 to vector<1x128xf32>
    %241 = arith.mulf %240, %239 : vector<1x128xf32>
    %242 = math.tanh %241 : vector<1x128xf32>
    %cst_104 = arith.constant 1.000000e+00 : f32
    %243 = vector.broadcast %cst_104 : f32 to vector<1x128xf32>
    %244 = arith.addf %243, %242 : vector<1x128xf32>
    %cst_105 = arith.constant 5.000000e-01 : f32
    %245 = vector.broadcast %cst_105 : f32 to vector<1x128xf32>
    %246 = arith.mulf %245, %244 : vector<1x128xf32>
    %247 = arith.mulf %234, %246 : vector<1x128xf32>
    %c4_106 = arith.constant 4 : index
    %c0_107 = arith.constant 0 : index
    %248 = memref.load %arg3[%c4_106, %c0_107] : memref<16x4xf32, #tpu.memory_space<smem>>
    %249 = vector.broadcast %248 : f32 to vector<1x128xf32>
    %250 = arith.mulf %247, %249 : vector<1x128xf32>
    %251 = arith.addf %204, %250 : vector<1x128xf32>
    %c4_108 = arith.constant 4 : index
    %c1_109 = arith.constant 1 : index
    %252 = memref.load %arg3[%c4_108, %c1_109] : memref<16x4xf32, #tpu.memory_space<smem>>
    %253 = vector.broadcast %252 : f32 to vector<1x128xf32>
    %254 = arith.mulf %247, %253 : vector<1x128xf32>
    %255 = arith.addf %208, %254 : vector<1x128xf32>
    %c4_110 = arith.constant 4 : index
    %c2_111 = arith.constant 2 : index
    %256 = memref.load %arg3[%c4_110, %c2_111] : memref<16x4xf32, #tpu.memory_space<smem>>
    %257 = vector.broadcast %256 : f32 to vector<1x128xf32>
    %258 = arith.mulf %247, %257 : vector<1x128xf32>
    %259 = arith.addf %212, %258 : vector<1x128xf32>
    %c4_112 = arith.constant 4 : index
    %c3_113 = arith.constant 3 : index
    %260 = memref.load %arg3[%c4_112, %c3_113] : memref<16x4xf32, #tpu.memory_space<smem>>
    %261 = vector.broadcast %260 : f32 to vector<1x128xf32>
    %262 = arith.mulf %247, %261 : vector<1x128xf32>
    %263 = arith.addf %216, %262 : vector<1x128xf32>
    %c0_114 = arith.constant 0 : index
    %c5 = arith.constant 5 : index
    %264 = memref.load %arg1[%c0_114, %c5] : memref<4x16xf32, #tpu.memory_space<smem>>
    %265 = vector.broadcast %264 : f32 to vector<1x128xf32>
    %266 = arith.mulf %29, %265 : vector<1x128xf32>
    %c1_115 = arith.constant 1 : index
    %c5_116 = arith.constant 5 : index
    %267 = memref.load %arg1[%c1_115, %c5_116] : memref<4x16xf32, #tpu.memory_space<smem>>
    %268 = vector.broadcast %267 : f32 to vector<1x128xf32>
    %269 = arith.mulf %30, %268 : vector<1x128xf32>
    %270 = arith.addf %266, %269 : vector<1x128xf32>
    %c2_117 = arith.constant 2 : index
    %c5_118 = arith.constant 5 : index
    %271 = memref.load %arg1[%c2_117, %c5_118] : memref<4x16xf32, #tpu.memory_space<smem>>
    %272 = vector.broadcast %271 : f32 to vector<1x128xf32>
    %273 = arith.mulf %31, %272 : vector<1x128xf32>
    %274 = arith.addf %270, %273 : vector<1x128xf32>
    %c3_119 = arith.constant 3 : index
    %c5_120 = arith.constant 5 : index
    %275 = memref.load %arg1[%c3_119, %c5_120] : memref<4x16xf32, #tpu.memory_space<smem>>
    %276 = vector.broadcast %275 : f32 to vector<1x128xf32>
    %277 = arith.mulf %32, %276 : vector<1x128xf32>
    %278 = arith.addf %274, %277 : vector<1x128xf32>
    %c5_121 = arith.constant 5 : index
    %279 = memref.load %arg2[%c5_121] : memref<16xf32, #tpu.memory_space<smem>>
    %280 = vector.broadcast %279 : f32 to vector<1x128xf32>
    %281 = arith.addf %278, %280 : vector<1x128xf32>
    %282 = arith.mulf %281, %281 : vector<1x128xf32>
    %283 = arith.mulf %281, %282 : vector<1x128xf32>
    %cst_122 = arith.constant 4.471500e-02 : f32
    %284 = vector.broadcast %cst_122 : f32 to vector<1x128xf32>
    %285 = arith.mulf %284, %283 : vector<1x128xf32>
    %286 = arith.addf %281, %285 : vector<1x128xf32>
    %cst_123 = arith.constant 0.797884583 : f32
    %287 = vector.broadcast %cst_123 : f32 to vector<1x128xf32>
    %288 = arith.mulf %287, %286 : vector<1x128xf32>
    %289 = math.tanh %288 : vector<1x128xf32>
    %cst_124 = arith.constant 1.000000e+00 : f32
    %290 = vector.broadcast %cst_124 : f32 to vector<1x128xf32>
    %291 = arith.addf %290, %289 : vector<1x128xf32>
    %cst_125 = arith.constant 5.000000e-01 : f32
    %292 = vector.broadcast %cst_125 : f32 to vector<1x128xf32>
    %293 = arith.mulf %292, %291 : vector<1x128xf32>
    %294 = arith.mulf %281, %293 : vector<1x128xf32>
    %c5_126 = arith.constant 5 : index
    %c0_127 = arith.constant 0 : index
    %295 = memref.load %arg3[%c5_126, %c0_127] : memref<16x4xf32, #tpu.memory_space<smem>>
    %296 = vector.broadcast %295 : f32 to vector<1x128xf32>
    %297 = arith.mulf %294, %296 : vector<1x128xf32>
    %298 = arith.addf %251, %297 : vector<1x128xf32>
    %c5_128 = arith.constant 5 : index
    %c1_129 = arith.constant 1 : index
    %299 = memref.load %arg3[%c5_128, %c1_129] : memref<16x4xf32, #tpu.memory_space<smem>>
    %300 = vector.broadcast %299 : f32 to vector<1x128xf32>
    %301 = arith.mulf %294, %300 : vector<1x128xf32>
    %302 = arith.addf %255, %301 : vector<1x128xf32>
    %c5_130 = arith.constant 5 : index
    %c2_131 = arith.constant 2 : index
    %303 = memref.load %arg3[%c5_130, %c2_131] : memref<16x4xf32, #tpu.memory_space<smem>>
    %304 = vector.broadcast %303 : f32 to vector<1x128xf32>
    %305 = arith.mulf %294, %304 : vector<1x128xf32>
    %306 = arith.addf %259, %305 : vector<1x128xf32>
    %c5_132 = arith.constant 5 : index
    %c3_133 = arith.constant 3 : index
    %307 = memref.load %arg3[%c5_132, %c3_133] : memref<16x4xf32, #tpu.memory_space<smem>>
    %308 = vector.broadcast %307 : f32 to vector<1x128xf32>
    %309 = arith.mulf %294, %308 : vector<1x128xf32>
    %310 = arith.addf %263, %309 : vector<1x128xf32>
    %c0_134 = arith.constant 0 : index
    %c6 = arith.constant 6 : index
    %311 = memref.load %arg1[%c0_134, %c6] : memref<4x16xf32, #tpu.memory_space<smem>>
    %312 = vector.broadcast %311 : f32 to vector<1x128xf32>
    %313 = arith.mulf %29, %312 : vector<1x128xf32>
    %c1_135 = arith.constant 1 : index
    %c6_136 = arith.constant 6 : index
    %314 = memref.load %arg1[%c1_135, %c6_136] : memref<4x16xf32, #tpu.memory_space<smem>>
    %315 = vector.broadcast %314 : f32 to vector<1x128xf32>
    %316 = arith.mulf %30, %315 : vector<1x128xf32>
    %317 = arith.addf %313, %316 : vector<1x128xf32>
    %c2_137 = arith.constant 2 : index
    %c6_138 = arith.constant 6 : index
    %318 = memref.load %arg1[%c2_137, %c6_138] : memref<4x16xf32, #tpu.memory_space<smem>>
    %319 = vector.broadcast %318 : f32 to vector<1x128xf32>
    %320 = arith.mulf %31, %319 : vector<1x128xf32>
    %321 = arith.addf %317, %320 : vector<1x128xf32>
    %c3_139 = arith.constant 3 : index
    %c6_140 = arith.constant 6 : index
    %322 = memref.load %arg1[%c3_139, %c6_140] : memref<4x16xf32, #tpu.memory_space<smem>>
    %323 = vector.broadcast %322 : f32 to vector<1x128xf32>
    %324 = arith.mulf %32, %323 : vector<1x128xf32>
    %325 = arith.addf %321, %324 : vector<1x128xf32>
    %c6_141 = arith.constant 6 : index
    %326 = memref.load %arg2[%c6_141] : memref<16xf32, #tpu.memory_space<smem>>
    %327 = vector.broadcast %326 : f32 to vector<1x128xf32>
    %328 = arith.addf %325, %327 : vector<1x128xf32>
    %329 = arith.mulf %328, %328 : vector<1x128xf32>
    %330 = arith.mulf %328, %329 : vector<1x128xf32>
    %cst_142 = arith.constant 4.471500e-02 : f32
    %331 = vector.broadcast %cst_142 : f32 to vector<1x128xf32>
    %332 = arith.mulf %331, %330 : vector<1x128xf32>
    %333 = arith.addf %328, %332 : vector<1x128xf32>
    %cst_143 = arith.constant 0.797884583 : f32
    %334 = vector.broadcast %cst_143 : f32 to vector<1x128xf32>
    %335 = arith.mulf %334, %333 : vector<1x128xf32>
    %336 = math.tanh %335 : vector<1x128xf32>
    %cst_144 = arith.constant 1.000000e+00 : f32
    %337 = vector.broadcast %cst_144 : f32 to vector<1x128xf32>
    %338 = arith.addf %337, %336 : vector<1x128xf32>
    %cst_145 = arith.constant 5.000000e-01 : f32
    %339 = vector.broadcast %cst_145 : f32 to vector<1x128xf32>
    %340 = arith.mulf %339, %338 : vector<1x128xf32>
    %341 = arith.mulf %328, %340 : vector<1x128xf32>
    %c6_146 = arith.constant 6 : index
    %c0_147 = arith.constant 0 : index
    %342 = memref.load %arg3[%c6_146, %c0_147] : memref<16x4xf32, #tpu.memory_space<smem>>
    %343 = vector.broadcast %342 : f32 to vector<1x128xf32>
    %344 = arith.mulf %341, %343 : vector<1x128xf32>
    %345 = arith.addf %298, %344 : vector<1x128xf32>
    %c6_148 = arith.constant 6 : index
    %c1_149 = arith.constant 1 : index
    %346 = memref.load %arg3[%c6_148, %c1_149] : memref<16x4xf32, #tpu.memory_space<smem>>
    %347 = vector.broadcast %346 : f32 to vector<1x128xf32>
    %348 = arith.mulf %341, %347 : vector<1x128xf32>
    %349 = arith.addf %302, %348 : vector<1x128xf32>
    %c6_150 = arith.constant 6 : index
    %c2_151 = arith.constant 2 : index
    %350 = memref.load %arg3[%c6_150, %c2_151] : memref<16x4xf32, #tpu.memory_space<smem>>
    %351 = vector.broadcast %350 : f32 to vector<1x128xf32>
    %352 = arith.mulf %341, %351 : vector<1x128xf32>
    %353 = arith.addf %306, %352 : vector<1x128xf32>
    %c6_152 = arith.constant 6 : index
    %c3_153 = arith.constant 3 : index
    %354 = memref.load %arg3[%c6_152, %c3_153] : memref<16x4xf32, #tpu.memory_space<smem>>
    %355 = vector.broadcast %354 : f32 to vector<1x128xf32>
    %356 = arith.mulf %341, %355 : vector<1x128xf32>
    %357 = arith.addf %310, %356 : vector<1x128xf32>
    %c0_154 = arith.constant 0 : index
    %c7 = arith.constant 7 : index
    %358 = memref.load %arg1[%c0_154, %c7] : memref<4x16xf32, #tpu.memory_space<smem>>
    %359 = vector.broadcast %358 : f32 to vector<1x128xf32>
    %360 = arith.mulf %29, %359 : vector<1x128xf32>
    %c1_155 = arith.constant 1 : index
    %c7_156 = arith.constant 7 : index
    %361 = memref.load %arg1[%c1_155, %c7_156] : memref<4x16xf32, #tpu.memory_space<smem>>
    %362 = vector.broadcast %361 : f32 to vector<1x128xf32>
    %363 = arith.mulf %30, %362 : vector<1x128xf32>
    %364 = arith.addf %360, %363 : vector<1x128xf32>
    %c2_157 = arith.constant 2 : index
    %c7_158 = arith.constant 7 : index
    %365 = memref.load %arg1[%c2_157, %c7_158] : memref<4x16xf32, #tpu.memory_space<smem>>
    %366 = vector.broadcast %365 : f32 to vector<1x128xf32>
    %367 = arith.mulf %31, %366 : vector<1x128xf32>
    %368 = arith.addf %364, %367 : vector<1x128xf32>
    %c3_159 = arith.constant 3 : index
    %c7_160 = arith.constant 7 : index
    %369 = memref.load %arg1[%c3_159, %c7_160] : memref<4x16xf32, #tpu.memory_space<smem>>
    %370 = vector.broadcast %369 : f32 to vector<1x128xf32>
    %371 = arith.mulf %32, %370 : vector<1x128xf32>
    %372 = arith.addf %368, %371 : vector<1x128xf32>
    %c7_161 = arith.constant 7 : index
    %373 = memref.load %arg2[%c7_161] : memref<16xf32, #tpu.memory_space<smem>>
    %374 = vector.broadcast %373 : f32 to vector<1x128xf32>
    %375 = arith.addf %372, %374 : vector<1x128xf32>
    %376 = arith.mulf %375, %375 : vector<1x128xf32>
    %377 = arith.mulf %375, %376 : vector<1x128xf32>
    %cst_162 = arith.constant 4.471500e-02 : f32
    %378 = vector.broadcast %cst_162 : f32 to vector<1x128xf32>
    %379 = arith.mulf %378, %377 : vector<1x128xf32>
    %380 = arith.addf %375, %379 : vector<1x128xf32>
    %cst_163 = arith.constant 0.797884583 : f32
    %381 = vector.broadcast %cst_163 : f32 to vector<1x128xf32>
    %382 = arith.mulf %381, %380 : vector<1x128xf32>
    %383 = math.tanh %382 : vector<1x128xf32>
    %cst_164 = arith.constant 1.000000e+00 : f32
    %384 = vector.broadcast %cst_164 : f32 to vector<1x128xf32>
    %385 = arith.addf %384, %383 : vector<1x128xf32>
    %cst_165 = arith.constant 5.000000e-01 : f32
    %386 = vector.broadcast %cst_165 : f32 to vector<1x128xf32>
    %387 = arith.mulf %386, %385 : vector<1x128xf32>
    %388 = arith.mulf %375, %387 : vector<1x128xf32>
    %c7_166 = arith.constant 7 : index
    %c0_167 = arith.constant 0 : index
    %389 = memref.load %arg3[%c7_166, %c0_167] : memref<16x4xf32, #tpu.memory_space<smem>>
    %390 = vector.broadcast %389 : f32 to vector<1x128xf32>
    %391 = arith.mulf %388, %390 : vector<1x128xf32>
    %392 = arith.addf %345, %391 : vector<1x128xf32>
    %c7_168 = arith.constant 7 : index
    %c1_169 = arith.constant 1 : index
    %393 = memref.load %arg3[%c7_168, %c1_169] : memref<16x4xf32, #tpu.memory_space<smem>>
    %394 = vector.broadcast %393 : f32 to vector<1x128xf32>
    %395 = arith.mulf %388, %394 : vector<1x128xf32>
    %396 = arith.addf %349, %395 : vector<1x128xf32>
    %c7_170 = arith.constant 7 : index
    %c2_171 = arith.constant 2 : index
    %397 = memref.load %arg3[%c7_170, %c2_171] : memref<16x4xf32, #tpu.memory_space<smem>>
    %398 = vector.broadcast %397 : f32 to vector<1x128xf32>
    %399 = arith.mulf %388, %398 : vector<1x128xf32>
    %400 = arith.addf %353, %399 : vector<1x128xf32>
    %c7_172 = arith.constant 7 : index
    %c3_173 = arith.constant 3 : index
    %401 = memref.load %arg3[%c7_172, %c3_173] : memref<16x4xf32, #tpu.memory_space<smem>>
    %402 = vector.broadcast %401 : f32 to vector<1x128xf32>
    %403 = arith.mulf %388, %402 : vector<1x128xf32>
    %404 = arith.addf %357, %403 : vector<1x128xf32>
    %c0_174 = arith.constant 0 : index
    %c8 = arith.constant 8 : index
    %405 = memref.load %arg1[%c0_174, %c8] : memref<4x16xf32, #tpu.memory_space<smem>>
    %406 = vector.broadcast %405 : f32 to vector<1x128xf32>
    %407 = arith.mulf %29, %406 : vector<1x128xf32>
    %c1_175 = arith.constant 1 : index
    %c8_176 = arith.constant 8 : index
    %408 = memref.load %arg1[%c1_175, %c8_176] : memref<4x16xf32, #tpu.memory_space<smem>>
    %409 = vector.broadcast %408 : f32 to vector<1x128xf32>
    %410 = arith.mulf %30, %409 : vector<1x128xf32>
    %411 = arith.addf %407, %410 : vector<1x128xf32>
    %c2_177 = arith.constant 2 : index
    %c8_178 = arith.constant 8 : index
    %412 = memref.load %arg1[%c2_177, %c8_178] : memref<4x16xf32, #tpu.memory_space<smem>>
    %413 = vector.broadcast %412 : f32 to vector<1x128xf32>
    %414 = arith.mulf %31, %413 : vector<1x128xf32>
    %415 = arith.addf %411, %414 : vector<1x128xf32>
    %c3_179 = arith.constant 3 : index
    %c8_180 = arith.constant 8 : index
    %416 = memref.load %arg1[%c3_179, %c8_180] : memref<4x16xf32, #tpu.memory_space<smem>>
    %417 = vector.broadcast %416 : f32 to vector<1x128xf32>
    %418 = arith.mulf %32, %417 : vector<1x128xf32>
    %419 = arith.addf %415, %418 : vector<1x128xf32>
    %c8_181 = arith.constant 8 : index
    %420 = memref.load %arg2[%c8_181] : memref<16xf32, #tpu.memory_space<smem>>
    %421 = vector.broadcast %420 : f32 to vector<1x128xf32>
    %422 = arith.addf %419, %421 : vector<1x128xf32>
    %423 = arith.mulf %422, %422 : vector<1x128xf32>
    %424 = arith.mulf %422, %423 : vector<1x128xf32>
    %cst_182 = arith.constant 4.471500e-02 : f32
    %425 = vector.broadcast %cst_182 : f32 to vector<1x128xf32>
    %426 = arith.mulf %425, %424 : vector<1x128xf32>
    %427 = arith.addf %422, %426 : vector<1x128xf32>
    %cst_183 = arith.constant 0.797884583 : f32
    %428 = vector.broadcast %cst_183 : f32 to vector<1x128xf32>
    %429 = arith.mulf %428, %427 : vector<1x128xf32>
    %430 = math.tanh %429 : vector<1x128xf32>
    %cst_184 = arith.constant 1.000000e+00 : f32
    %431 = vector.broadcast %cst_184 : f32 to vector<1x128xf32>
    %432 = arith.addf %431, %430 : vector<1x128xf32>
    %cst_185 = arith.constant 5.000000e-01 : f32
    %433 = vector.broadcast %cst_185 : f32 to vector<1x128xf32>
    %434 = arith.mulf %433, %432 : vector<1x128xf32>
    %435 = arith.mulf %422, %434 : vector<1x128xf32>
    %c8_186 = arith.constant 8 : index
    %c0_187 = arith.constant 0 : index
    %436 = memref.load %arg3[%c8_186, %c0_187] : memref<16x4xf32, #tpu.memory_space<smem>>
    %437 = vector.broadcast %436 : f32 to vector<1x128xf32>
    %438 = arith.mulf %435, %437 : vector<1x128xf32>
    %439 = arith.addf %392, %438 : vector<1x128xf32>
    %c8_188 = arith.constant 8 : index
    %c1_189 = arith.constant 1 : index
    %440 = memref.load %arg3[%c8_188, %c1_189] : memref<16x4xf32, #tpu.memory_space<smem>>
    %441 = vector.broadcast %440 : f32 to vector<1x128xf32>
    %442 = arith.mulf %435, %441 : vector<1x128xf32>
    %443 = arith.addf %396, %442 : vector<1x128xf32>
    %c8_190 = arith.constant 8 : index
    %c2_191 = arith.constant 2 : index
    %444 = memref.load %arg3[%c8_190, %c2_191] : memref<16x4xf32, #tpu.memory_space<smem>>
    %445 = vector.broadcast %444 : f32 to vector<1x128xf32>
    %446 = arith.mulf %435, %445 : vector<1x128xf32>
    %447 = arith.addf %400, %446 : vector<1x128xf32>
    %c8_192 = arith.constant 8 : index
    %c3_193 = arith.constant 3 : index
    %448 = memref.load %arg3[%c8_192, %c3_193] : memref<16x4xf32, #tpu.memory_space<smem>>
    %449 = vector.broadcast %448 : f32 to vector<1x128xf32>
    %450 = arith.mulf %435, %449 : vector<1x128xf32>
    %451 = arith.addf %404, %450 : vector<1x128xf32>
    %c0_194 = arith.constant 0 : index
    %c9 = arith.constant 9 : index
    %452 = memref.load %arg1[%c0_194, %c9] : memref<4x16xf32, #tpu.memory_space<smem>>
    %453 = vector.broadcast %452 : f32 to vector<1x128xf32>
    %454 = arith.mulf %29, %453 : vector<1x128xf32>
    %c1_195 = arith.constant 1 : index
    %c9_196 = arith.constant 9 : index
    %455 = memref.load %arg1[%c1_195, %c9_196] : memref<4x16xf32, #tpu.memory_space<smem>>
    %456 = vector.broadcast %455 : f32 to vector<1x128xf32>
    %457 = arith.mulf %30, %456 : vector<1x128xf32>
    %458 = arith.addf %454, %457 : vector<1x128xf32>
    %c2_197 = arith.constant 2 : index
    %c9_198 = arith.constant 9 : index
    %459 = memref.load %arg1[%c2_197, %c9_198] : memref<4x16xf32, #tpu.memory_space<smem>>
    %460 = vector.broadcast %459 : f32 to vector<1x128xf32>
    %461 = arith.mulf %31, %460 : vector<1x128xf32>
    %462 = arith.addf %458, %461 : vector<1x128xf32>
    %c3_199 = arith.constant 3 : index
    %c9_200 = arith.constant 9 : index
    %463 = memref.load %arg1[%c3_199, %c9_200] : memref<4x16xf32, #tpu.memory_space<smem>>
    %464 = vector.broadcast %463 : f32 to vector<1x128xf32>
    %465 = arith.mulf %32, %464 : vector<1x128xf32>
    %466 = arith.addf %462, %465 : vector<1x128xf32>
    %c9_201 = arith.constant 9 : index
    %467 = memref.load %arg2[%c9_201] : memref<16xf32, #tpu.memory_space<smem>>
    %468 = vector.broadcast %467 : f32 to vector<1x128xf32>
    %469 = arith.addf %466, %468 : vector<1x128xf32>
    %470 = arith.mulf %469, %469 : vector<1x128xf32>
    %471 = arith.mulf %469, %470 : vector<1x128xf32>
    %cst_202 = arith.constant 4.471500e-02 : f32
    %472 = vector.broadcast %cst_202 : f32 to vector<1x128xf32>
    %473 = arith.mulf %472, %471 : vector<1x128xf32>
    %474 = arith.addf %469, %473 : vector<1x128xf32>
    %cst_203 = arith.constant 0.797884583 : f32
    %475 = vector.broadcast %cst_203 : f32 to vector<1x128xf32>
    %476 = arith.mulf %475, %474 : vector<1x128xf32>
    %477 = math.tanh %476 : vector<1x128xf32>
    %cst_204 = arith.constant 1.000000e+00 : f32
    %478 = vector.broadcast %cst_204 : f32 to vector<1x128xf32>
    %479 = arith.addf %478, %477 : vector<1x128xf32>
    %cst_205 = arith.constant 5.000000e-01 : f32
    %480 = vector.broadcast %cst_205 : f32 to vector<1x128xf32>
    %481 = arith.mulf %480, %479 : vector<1x128xf32>
    %482 = arith.mulf %469, %481 : vector<1x128xf32>
    %c9_206 = arith.constant 9 : index
    %c0_207 = arith.constant 0 : index
    %483 = memref.load %arg3[%c9_206, %c0_207] : memref<16x4xf32, #tpu.memory_space<smem>>
    %484 = vector.broadcast %483 : f32 to vector<1x128xf32>
    %485 = arith.mulf %482, %484 : vector<1x128xf32>
    %486 = arith.addf %439, %485 : vector<1x128xf32>
    %c9_208 = arith.constant 9 : index
    %c1_209 = arith.constant 1 : index
    %487 = memref.load %arg3[%c9_208, %c1_209] : memref<16x4xf32, #tpu.memory_space<smem>>
    %488 = vector.broadcast %487 : f32 to vector<1x128xf32>
    %489 = arith.mulf %482, %488 : vector<1x128xf32>
    %490 = arith.addf %443, %489 : vector<1x128xf32>
    %c9_210 = arith.constant 9 : index
    %c2_211 = arith.constant 2 : index
    %491 = memref.load %arg3[%c9_210, %c2_211] : memref<16x4xf32, #tpu.memory_space<smem>>
    %492 = vector.broadcast %491 : f32 to vector<1x128xf32>
    %493 = arith.mulf %482, %492 : vector<1x128xf32>
    %494 = arith.addf %447, %493 : vector<1x128xf32>
    %c9_212 = arith.constant 9 : index
    %c3_213 = arith.constant 3 : index
    %495 = memref.load %arg3[%c9_212, %c3_213] : memref<16x4xf32, #tpu.memory_space<smem>>
    %496 = vector.broadcast %495 : f32 to vector<1x128xf32>
    %497 = arith.mulf %482, %496 : vector<1x128xf32>
    %498 = arith.addf %451, %497 : vector<1x128xf32>
    %c0_214 = arith.constant 0 : index
    %c10 = arith.constant 10 : index
    %499 = memref.load %arg1[%c0_214, %c10] : memref<4x16xf32, #tpu.memory_space<smem>>
    %500 = vector.broadcast %499 : f32 to vector<1x128xf32>
    %501 = arith.mulf %29, %500 : vector<1x128xf32>
    %c1_215 = arith.constant 1 : index
    %c10_216 = arith.constant 10 : index
    %502 = memref.load %arg1[%c1_215, %c10_216] : memref<4x16xf32, #tpu.memory_space<smem>>
    %503 = vector.broadcast %502 : f32 to vector<1x128xf32>
    %504 = arith.mulf %30, %503 : vector<1x128xf32>
    %505 = arith.addf %501, %504 : vector<1x128xf32>
    %c2_217 = arith.constant 2 : index
    %c10_218 = arith.constant 10 : index
    %506 = memref.load %arg1[%c2_217, %c10_218] : memref<4x16xf32, #tpu.memory_space<smem>>
    %507 = vector.broadcast %506 : f32 to vector<1x128xf32>
    %508 = arith.mulf %31, %507 : vector<1x128xf32>
    %509 = arith.addf %505, %508 : vector<1x128xf32>
    %c3_219 = arith.constant 3 : index
    %c10_220 = arith.constant 10 : index
    %510 = memref.load %arg1[%c3_219, %c10_220] : memref<4x16xf32, #tpu.memory_space<smem>>
    %511 = vector.broadcast %510 : f32 to vector<1x128xf32>
    %512 = arith.mulf %32, %511 : vector<1x128xf32>
    %513 = arith.addf %509, %512 : vector<1x128xf32>
    %c10_221 = arith.constant 10 : index
    %514 = memref.load %arg2[%c10_221] : memref<16xf32, #tpu.memory_space<smem>>
    %515 = vector.broadcast %514 : f32 to vector<1x128xf32>
    %516 = arith.addf %513, %515 : vector<1x128xf32>
    %517 = arith.mulf %516, %516 : vector<1x128xf32>
    %518 = arith.mulf %516, %517 : vector<1x128xf32>
    %cst_222 = arith.constant 4.471500e-02 : f32
    %519 = vector.broadcast %cst_222 : f32 to vector<1x128xf32>
    %520 = arith.mulf %519, %518 : vector<1x128xf32>
    %521 = arith.addf %516, %520 : vector<1x128xf32>
    %cst_223 = arith.constant 0.797884583 : f32
    %522 = vector.broadcast %cst_223 : f32 to vector<1x128xf32>
    %523 = arith.mulf %522, %521 : vector<1x128xf32>
    %524 = math.tanh %523 : vector<1x128xf32>
    %cst_224 = arith.constant 1.000000e+00 : f32
    %525 = vector.broadcast %cst_224 : f32 to vector<1x128xf32>
    %526 = arith.addf %525, %524 : vector<1x128xf32>
    %cst_225 = arith.constant 5.000000e-01 : f32
    %527 = vector.broadcast %cst_225 : f32 to vector<1x128xf32>
    %528 = arith.mulf %527, %526 : vector<1x128xf32>
    %529 = arith.mulf %516, %528 : vector<1x128xf32>
    %c10_226 = arith.constant 10 : index
    %c0_227 = arith.constant 0 : index
    %530 = memref.load %arg3[%c10_226, %c0_227] : memref<16x4xf32, #tpu.memory_space<smem>>
    %531 = vector.broadcast %530 : f32 to vector<1x128xf32>
    %532 = arith.mulf %529, %531 : vector<1x128xf32>
    %533 = arith.addf %486, %532 : vector<1x128xf32>
    %c10_228 = arith.constant 10 : index
    %c1_229 = arith.constant 1 : index
    %534 = memref.load %arg3[%c10_228, %c1_229] : memref<16x4xf32, #tpu.memory_space<smem>>
    %535 = vector.broadcast %534 : f32 to vector<1x128xf32>
    %536 = arith.mulf %529, %535 : vector<1x128xf32>
    %537 = arith.addf %490, %536 : vector<1x128xf32>
    %c10_230 = arith.constant 10 : index
    %c2_231 = arith.constant 2 : index
    %538 = memref.load %arg3[%c10_230, %c2_231] : memref<16x4xf32, #tpu.memory_space<smem>>
    %539 = vector.broadcast %538 : f32 to vector<1x128xf32>
    %540 = arith.mulf %529, %539 : vector<1x128xf32>
    %541 = arith.addf %494, %540 : vector<1x128xf32>
    %c10_232 = arith.constant 10 : index
    %c3_233 = arith.constant 3 : index
    %542 = memref.load %arg3[%c10_232, %c3_233] : memref<16x4xf32, #tpu.memory_space<smem>>
    %543 = vector.broadcast %542 : f32 to vector<1x128xf32>
    %544 = arith.mulf %529, %543 : vector<1x128xf32>
    %545 = arith.addf %498, %544 : vector<1x128xf32>
    %c0_234 = arith.constant 0 : index
    %c11 = arith.constant 11 : index
    %546 = memref.load %arg1[%c0_234, %c11] : memref<4x16xf32, #tpu.memory_space<smem>>
    %547 = vector.broadcast %546 : f32 to vector<1x128xf32>
    %548 = arith.mulf %29, %547 : vector<1x128xf32>
    %c1_235 = arith.constant 1 : index
    %c11_236 = arith.constant 11 : index
    %549 = memref.load %arg1[%c1_235, %c11_236] : memref<4x16xf32, #tpu.memory_space<smem>>
    %550 = vector.broadcast %549 : f32 to vector<1x128xf32>
    %551 = arith.mulf %30, %550 : vector<1x128xf32>
    %552 = arith.addf %548, %551 : vector<1x128xf32>
    %c2_237 = arith.constant 2 : index
    %c11_238 = arith.constant 11 : index
    %553 = memref.load %arg1[%c2_237, %c11_238] : memref<4x16xf32, #tpu.memory_space<smem>>
    %554 = vector.broadcast %553 : f32 to vector<1x128xf32>
    %555 = arith.mulf %31, %554 : vector<1x128xf32>
    %556 = arith.addf %552, %555 : vector<1x128xf32>
    %c3_239 = arith.constant 3 : index
    %c11_240 = arith.constant 11 : index
    %557 = memref.load %arg1[%c3_239, %c11_240] : memref<4x16xf32, #tpu.memory_space<smem>>
    %558 = vector.broadcast %557 : f32 to vector<1x128xf32>
    %559 = arith.mulf %32, %558 : vector<1x128xf32>
    %560 = arith.addf %556, %559 : vector<1x128xf32>
    %c11_241 = arith.constant 11 : index
    %561 = memref.load %arg2[%c11_241] : memref<16xf32, #tpu.memory_space<smem>>
    %562 = vector.broadcast %561 : f32 to vector<1x128xf32>
    %563 = arith.addf %560, %562 : vector<1x128xf32>
    %564 = arith.mulf %563, %563 : vector<1x128xf32>
    %565 = arith.mulf %563, %564 : vector<1x128xf32>
    %cst_242 = arith.constant 4.471500e-02 : f32
    %566 = vector.broadcast %cst_242 : f32 to vector<1x128xf32>
    %567 = arith.mulf %566, %565 : vector<1x128xf32>
    %568 = arith.addf %563, %567 : vector<1x128xf32>
    %cst_243 = arith.constant 0.797884583 : f32
    %569 = vector.broadcast %cst_243 : f32 to vector<1x128xf32>
    %570 = arith.mulf %569, %568 : vector<1x128xf32>
    %571 = math.tanh %570 : vector<1x128xf32>
    %cst_244 = arith.constant 1.000000e+00 : f32
    %572 = vector.broadcast %cst_244 : f32 to vector<1x128xf32>
    %573 = arith.addf %572, %571 : vector<1x128xf32>
    %cst_245 = arith.constant 5.000000e-01 : f32
    %574 = vector.broadcast %cst_245 : f32 to vector<1x128xf32>
    %575 = arith.mulf %574, %573 : vector<1x128xf32>
    %576 = arith.mulf %563, %575 : vector<1x128xf32>
    %c11_246 = arith.constant 11 : index
    %c0_247 = arith.constant 0 : index
    %577 = memref.load %arg3[%c11_246, %c0_247] : memref<16x4xf32, #tpu.memory_space<smem>>
    %578 = vector.broadcast %577 : f32 to vector<1x128xf32>
    %579 = arith.mulf %576, %578 : vector<1x128xf32>
    %580 = arith.addf %533, %579 : vector<1x128xf32>
    %c11_248 = arith.constant 11 : index
    %c1_249 = arith.constant 1 : index
    %581 = memref.load %arg3[%c11_248, %c1_249] : memref<16x4xf32, #tpu.memory_space<smem>>
    %582 = vector.broadcast %581 : f32 to vector<1x128xf32>
    %583 = arith.mulf %576, %582 : vector<1x128xf32>
    %584 = arith.addf %537, %583 : vector<1x128xf32>
    %c11_250 = arith.constant 11 : index
    %c2_251 = arith.constant 2 : index
    %585 = memref.load %arg3[%c11_250, %c2_251] : memref<16x4xf32, #tpu.memory_space<smem>>
    %586 = vector.broadcast %585 : f32 to vector<1x128xf32>
    %587 = arith.mulf %576, %586 : vector<1x128xf32>
    %588 = arith.addf %541, %587 : vector<1x128xf32>
    %c11_252 = arith.constant 11 : index
    %c3_253 = arith.constant 3 : index
    %589 = memref.load %arg3[%c11_252, %c3_253] : memref<16x4xf32, #tpu.memory_space<smem>>
    %590 = vector.broadcast %589 : f32 to vector<1x128xf32>
    %591 = arith.mulf %576, %590 : vector<1x128xf32>
    %592 = arith.addf %545, %591 : vector<1x128xf32>
    %c0_254 = arith.constant 0 : index
    %c12 = arith.constant 12 : index
    %593 = memref.load %arg1[%c0_254, %c12] : memref<4x16xf32, #tpu.memory_space<smem>>
    %594 = vector.broadcast %593 : f32 to vector<1x128xf32>
    %595 = arith.mulf %29, %594 : vector<1x128xf32>
    %c1_255 = arith.constant 1 : index
    %c12_256 = arith.constant 12 : index
    %596 = memref.load %arg1[%c1_255, %c12_256] : memref<4x16xf32, #tpu.memory_space<smem>>
    %597 = vector.broadcast %596 : f32 to vector<1x128xf32>
    %598 = arith.mulf %30, %597 : vector<1x128xf32>
    %599 = arith.addf %595, %598 : vector<1x128xf32>
    %c2_257 = arith.constant 2 : index
    %c12_258 = arith.constant 12 : index
    %600 = memref.load %arg1[%c2_257, %c12_258] : memref<4x16xf32, #tpu.memory_space<smem>>
    %601 = vector.broadcast %600 : f32 to vector<1x128xf32>
    %602 = arith.mulf %31, %601 : vector<1x128xf32>
    %603 = arith.addf %599, %602 : vector<1x128xf32>
    %c3_259 = arith.constant 3 : index
    %c12_260 = arith.constant 12 : index
    %604 = memref.load %arg1[%c3_259, %c12_260] : memref<4x16xf32, #tpu.memory_space<smem>>
    %605 = vector.broadcast %604 : f32 to vector<1x128xf32>
    %606 = arith.mulf %32, %605 : vector<1x128xf32>
    %607 = arith.addf %603, %606 : vector<1x128xf32>
    %c12_261 = arith.constant 12 : index
    %608 = memref.load %arg2[%c12_261] : memref<16xf32, #tpu.memory_space<smem>>
    %609 = vector.broadcast %608 : f32 to vector<1x128xf32>
    %610 = arith.addf %607, %609 : vector<1x128xf32>
    %611 = arith.mulf %610, %610 : vector<1x128xf32>
    %612 = arith.mulf %610, %611 : vector<1x128xf32>
    %cst_262 = arith.constant 4.471500e-02 : f32
    %613 = vector.broadcast %cst_262 : f32 to vector<1x128xf32>
    %614 = arith.mulf %613, %612 : vector<1x128xf32>
    %615 = arith.addf %610, %614 : vector<1x128xf32>
    %cst_263 = arith.constant 0.797884583 : f32
    %616 = vector.broadcast %cst_263 : f32 to vector<1x128xf32>
    %617 = arith.mulf %616, %615 : vector<1x128xf32>
    %618 = math.tanh %617 : vector<1x128xf32>
    %cst_264 = arith.constant 1.000000e+00 : f32
    %619 = vector.broadcast %cst_264 : f32 to vector<1x128xf32>
    %620 = arith.addf %619, %618 : vector<1x128xf32>
    %cst_265 = arith.constant 5.000000e-01 : f32
    %621 = vector.broadcast %cst_265 : f32 to vector<1x128xf32>
    %622 = arith.mulf %621, %620 : vector<1x128xf32>
    %623 = arith.mulf %610, %622 : vector<1x128xf32>
    %c12_266 = arith.constant 12 : index
    %c0_267 = arith.constant 0 : index
    %624 = memref.load %arg3[%c12_266, %c0_267] : memref<16x4xf32, #tpu.memory_space<smem>>
    %625 = vector.broadcast %624 : f32 to vector<1x128xf32>
    %626 = arith.mulf %623, %625 : vector<1x128xf32>
    %627 = arith.addf %580, %626 : vector<1x128xf32>
    %c12_268 = arith.constant 12 : index
    %c1_269 = arith.constant 1 : index
    %628 = memref.load %arg3[%c12_268, %c1_269] : memref<16x4xf32, #tpu.memory_space<smem>>
    %629 = vector.broadcast %628 : f32 to vector<1x128xf32>
    %630 = arith.mulf %623, %629 : vector<1x128xf32>
    %631 = arith.addf %584, %630 : vector<1x128xf32>
    %c12_270 = arith.constant 12 : index
    %c2_271 = arith.constant 2 : index
    %632 = memref.load %arg3[%c12_270, %c2_271] : memref<16x4xf32, #tpu.memory_space<smem>>
    %633 = vector.broadcast %632 : f32 to vector<1x128xf32>
    %634 = arith.mulf %623, %633 : vector<1x128xf32>
    %635 = arith.addf %588, %634 : vector<1x128xf32>
    %c12_272 = arith.constant 12 : index
    %c3_273 = arith.constant 3 : index
    %636 = memref.load %arg3[%c12_272, %c3_273] : memref<16x4xf32, #tpu.memory_space<smem>>
    %637 = vector.broadcast %636 : f32 to vector<1x128xf32>
    %638 = arith.mulf %623, %637 : vector<1x128xf32>
    %639 = arith.addf %592, %638 : vector<1x128xf32>
    %c0_274 = arith.constant 0 : index
    %c13 = arith.constant 13 : index
    %640 = memref.load %arg1[%c0_274, %c13] : memref<4x16xf32, #tpu.memory_space<smem>>
    %641 = vector.broadcast %640 : f32 to vector<1x128xf32>
    %642 = arith.mulf %29, %641 : vector<1x128xf32>
    %c1_275 = arith.constant 1 : index
    %c13_276 = arith.constant 13 : index
    %643 = memref.load %arg1[%c1_275, %c13_276] : memref<4x16xf32, #tpu.memory_space<smem>>
    %644 = vector.broadcast %643 : f32 to vector<1x128xf32>
    %645 = arith.mulf %30, %644 : vector<1x128xf32>
    %646 = arith.addf %642, %645 : vector<1x128xf32>
    %c2_277 = arith.constant 2 : index
    %c13_278 = arith.constant 13 : index
    %647 = memref.load %arg1[%c2_277, %c13_278] : memref<4x16xf32, #tpu.memory_space<smem>>
    %648 = vector.broadcast %647 : f32 to vector<1x128xf32>
    %649 = arith.mulf %31, %648 : vector<1x128xf32>
    %650 = arith.addf %646, %649 : vector<1x128xf32>
    %c3_279 = arith.constant 3 : index
    %c13_280 = arith.constant 13 : index
    %651 = memref.load %arg1[%c3_279, %c13_280] : memref<4x16xf32, #tpu.memory_space<smem>>
    %652 = vector.broadcast %651 : f32 to vector<1x128xf32>
    %653 = arith.mulf %32, %652 : vector<1x128xf32>
    %654 = arith.addf %650, %653 : vector<1x128xf32>
    %c13_281 = arith.constant 13 : index
    %655 = memref.load %arg2[%c13_281] : memref<16xf32, #tpu.memory_space<smem>>
    %656 = vector.broadcast %655 : f32 to vector<1x128xf32>
    %657 = arith.addf %654, %656 : vector<1x128xf32>
    %658 = arith.mulf %657, %657 : vector<1x128xf32>
    %659 = arith.mulf %657, %658 : vector<1x128xf32>
    %cst_282 = arith.constant 4.471500e-02 : f32
    %660 = vector.broadcast %cst_282 : f32 to vector<1x128xf32>
    %661 = arith.mulf %660, %659 : vector<1x128xf32>
    %662 = arith.addf %657, %661 : vector<1x128xf32>
    %cst_283 = arith.constant 0.797884583 : f32
    %663 = vector.broadcast %cst_283 : f32 to vector<1x128xf32>
    %664 = arith.mulf %663, %662 : vector<1x128xf32>
    %665 = math.tanh %664 : vector<1x128xf32>
    %cst_284 = arith.constant 1.000000e+00 : f32
    %666 = vector.broadcast %cst_284 : f32 to vector<1x128xf32>
    %667 = arith.addf %666, %665 : vector<1x128xf32>
    %cst_285 = arith.constant 5.000000e-01 : f32
    %668 = vector.broadcast %cst_285 : f32 to vector<1x128xf32>
    %669 = arith.mulf %668, %667 : vector<1x128xf32>
    %670 = arith.mulf %657, %669 : vector<1x128xf32>
    %c13_286 = arith.constant 13 : index
    %c0_287 = arith.constant 0 : index
    %671 = memref.load %arg3[%c13_286, %c0_287] : memref<16x4xf32, #tpu.memory_space<smem>>
    %672 = vector.broadcast %671 : f32 to vector<1x128xf32>
    %673 = arith.mulf %670, %672 : vector<1x128xf32>
    %674 = arith.addf %627, %673 : vector<1x128xf32>
    %c13_288 = arith.constant 13 : index
    %c1_289 = arith.constant 1 : index
    %675 = memref.load %arg3[%c13_288, %c1_289] : memref<16x4xf32, #tpu.memory_space<smem>>
    %676 = vector.broadcast %675 : f32 to vector<1x128xf32>
    %677 = arith.mulf %670, %676 : vector<1x128xf32>
    %678 = arith.addf %631, %677 : vector<1x128xf32>
    %c13_290 = arith.constant 13 : index
    %c2_291 = arith.constant 2 : index
    %679 = memref.load %arg3[%c13_290, %c2_291] : memref<16x4xf32, #tpu.memory_space<smem>>
    %680 = vector.broadcast %679 : f32 to vector<1x128xf32>
    %681 = arith.mulf %670, %680 : vector<1x128xf32>
    %682 = arith.addf %635, %681 : vector<1x128xf32>
    %c13_292 = arith.constant 13 : index
    %c3_293 = arith.constant 3 : index
    %683 = memref.load %arg3[%c13_292, %c3_293] : memref<16x4xf32, #tpu.memory_space<smem>>
    %684 = vector.broadcast %683 : f32 to vector<1x128xf32>
    %685 = arith.mulf %670, %684 : vector<1x128xf32>
    %686 = arith.addf %639, %685 : vector<1x128xf32>
    %c0_294 = arith.constant 0 : index
    %c14 = arith.constant 14 : index
    %687 = memref.load %arg1[%c0_294, %c14] : memref<4x16xf32, #tpu.memory_space<smem>>
    %688 = vector.broadcast %687 : f32 to vector<1x128xf32>
    %689 = arith.mulf %29, %688 : vector<1x128xf32>
    %c1_295 = arith.constant 1 : index
    %c14_296 = arith.constant 14 : index
    %690 = memref.load %arg1[%c1_295, %c14_296] : memref<4x16xf32, #tpu.memory_space<smem>>
    %691 = vector.broadcast %690 : f32 to vector<1x128xf32>
    %692 = arith.mulf %30, %691 : vector<1x128xf32>
    %693 = arith.addf %689, %692 : vector<1x128xf32>
    %c2_297 = arith.constant 2 : index
    %c14_298 = arith.constant 14 : index
    %694 = memref.load %arg1[%c2_297, %c14_298] : memref<4x16xf32, #tpu.memory_space<smem>>
    %695 = vector.broadcast %694 : f32 to vector<1x128xf32>
    %696 = arith.mulf %31, %695 : vector<1x128xf32>
    %697 = arith.addf %693, %696 : vector<1x128xf32>
    %c3_299 = arith.constant 3 : index
    %c14_300 = arith.constant 14 : index
    %698 = memref.load %arg1[%c3_299, %c14_300] : memref<4x16xf32, #tpu.memory_space<smem>>
    %699 = vector.broadcast %698 : f32 to vector<1x128xf32>
    %700 = arith.mulf %32, %699 : vector<1x128xf32>
    %701 = arith.addf %697, %700 : vector<1x128xf32>
    %c14_301 = arith.constant 14 : index
    %702 = memref.load %arg2[%c14_301] : memref<16xf32, #tpu.memory_space<smem>>
    %703 = vector.broadcast %702 : f32 to vector<1x128xf32>
    %704 = arith.addf %701, %703 : vector<1x128xf32>
    %705 = arith.mulf %704, %704 : vector<1x128xf32>
    %706 = arith.mulf %704, %705 : vector<1x128xf32>
    %cst_302 = arith.constant 4.471500e-02 : f32
    %707 = vector.broadcast %cst_302 : f32 to vector<1x128xf32>
    %708 = arith.mulf %707, %706 : vector<1x128xf32>
    %709 = arith.addf %704, %708 : vector<1x128xf32>
    %cst_303 = arith.constant 0.797884583 : f32
    %710 = vector.broadcast %cst_303 : f32 to vector<1x128xf32>
    %711 = arith.mulf %710, %709 : vector<1x128xf32>
    %712 = math.tanh %711 : vector<1x128xf32>
    %cst_304 = arith.constant 1.000000e+00 : f32
    %713 = vector.broadcast %cst_304 : f32 to vector<1x128xf32>
    %714 = arith.addf %713, %712 : vector<1x128xf32>
    %cst_305 = arith.constant 5.000000e-01 : f32
    %715 = vector.broadcast %cst_305 : f32 to vector<1x128xf32>
    %716 = arith.mulf %715, %714 : vector<1x128xf32>
    %717 = arith.mulf %704, %716 : vector<1x128xf32>
    %c14_306 = arith.constant 14 : index
    %c0_307 = arith.constant 0 : index
    %718 = memref.load %arg3[%c14_306, %c0_307] : memref<16x4xf32, #tpu.memory_space<smem>>
    %719 = vector.broadcast %718 : f32 to vector<1x128xf32>
    %720 = arith.mulf %717, %719 : vector<1x128xf32>
    %721 = arith.addf %674, %720 : vector<1x128xf32>
    %c14_308 = arith.constant 14 : index
    %c1_309 = arith.constant 1 : index
    %722 = memref.load %arg3[%c14_308, %c1_309] : memref<16x4xf32, #tpu.memory_space<smem>>
    %723 = vector.broadcast %722 : f32 to vector<1x128xf32>
    %724 = arith.mulf %717, %723 : vector<1x128xf32>
    %725 = arith.addf %678, %724 : vector<1x128xf32>
    %c14_310 = arith.constant 14 : index
    %c2_311 = arith.constant 2 : index
    %726 = memref.load %arg3[%c14_310, %c2_311] : memref<16x4xf32, #tpu.memory_space<smem>>
    %727 = vector.broadcast %726 : f32 to vector<1x128xf32>
    %728 = arith.mulf %717, %727 : vector<1x128xf32>
    %729 = arith.addf %682, %728 : vector<1x128xf32>
    %c14_312 = arith.constant 14 : index
    %c3_313 = arith.constant 3 : index
    %730 = memref.load %arg3[%c14_312, %c3_313] : memref<16x4xf32, #tpu.memory_space<smem>>
    %731 = vector.broadcast %730 : f32 to vector<1x128xf32>
    %732 = arith.mulf %717, %731 : vector<1x128xf32>
    %733 = arith.addf %686, %732 : vector<1x128xf32>
    %c0_314 = arith.constant 0 : index
    %c15 = arith.constant 15 : index
    %734 = memref.load %arg1[%c0_314, %c15] : memref<4x16xf32, #tpu.memory_space<smem>>
    %735 = vector.broadcast %734 : f32 to vector<1x128xf32>
    %736 = arith.mulf %29, %735 : vector<1x128xf32>
    %c1_315 = arith.constant 1 : index
    %c15_316 = arith.constant 15 : index
    %737 = memref.load %arg1[%c1_315, %c15_316] : memref<4x16xf32, #tpu.memory_space<smem>>
    %738 = vector.broadcast %737 : f32 to vector<1x128xf32>
    %739 = arith.mulf %30, %738 : vector<1x128xf32>
    %740 = arith.addf %736, %739 : vector<1x128xf32>
    %c2_317 = arith.constant 2 : index
    %c15_318 = arith.constant 15 : index
    %741 = memref.load %arg1[%c2_317, %c15_318] : memref<4x16xf32, #tpu.memory_space<smem>>
    %742 = vector.broadcast %741 : f32 to vector<1x128xf32>
    %743 = arith.mulf %31, %742 : vector<1x128xf32>
    %744 = arith.addf %740, %743 : vector<1x128xf32>
    %c3_319 = arith.constant 3 : index
    %c15_320 = arith.constant 15 : index
    %745 = memref.load %arg1[%c3_319, %c15_320] : memref<4x16xf32, #tpu.memory_space<smem>>
    %746 = vector.broadcast %745 : f32 to vector<1x128xf32>
    %747 = arith.mulf %32, %746 : vector<1x128xf32>
    %748 = arith.addf %744, %747 : vector<1x128xf32>
    %c15_321 = arith.constant 15 : index
    %749 = memref.load %arg2[%c15_321] : memref<16xf32, #tpu.memory_space<smem>>
    %750 = vector.broadcast %749 : f32 to vector<1x128xf32>
    %751 = arith.addf %748, %750 : vector<1x128xf32>
    %752 = arith.mulf %751, %751 : vector<1x128xf32>
    %753 = arith.mulf %751, %752 : vector<1x128xf32>
    %cst_322 = arith.constant 4.471500e-02 : f32
    %754 = vector.broadcast %cst_322 : f32 to vector<1x128xf32>
    %755 = arith.mulf %754, %753 : vector<1x128xf32>
    %756 = arith.addf %751, %755 : vector<1x128xf32>
    %cst_323 = arith.constant 0.797884583 : f32
    %757 = vector.broadcast %cst_323 : f32 to vector<1x128xf32>
    %758 = arith.mulf %757, %756 : vector<1x128xf32>
    %759 = math.tanh %758 : vector<1x128xf32>
    %cst_324 = arith.constant 1.000000e+00 : f32
    %760 = vector.broadcast %cst_324 : f32 to vector<1x128xf32>
    %761 = arith.addf %760, %759 : vector<1x128xf32>
    %cst_325 = arith.constant 5.000000e-01 : f32
    %762 = vector.broadcast %cst_325 : f32 to vector<1x128xf32>
    %763 = arith.mulf %762, %761 : vector<1x128xf32>
    %764 = arith.mulf %751, %763 : vector<1x128xf32>
    %c15_326 = arith.constant 15 : index
    %c0_327 = arith.constant 0 : index
    %765 = memref.load %arg3[%c15_326, %c0_327] : memref<16x4xf32, #tpu.memory_space<smem>>
    %766 = vector.broadcast %765 : f32 to vector<1x128xf32>
    %767 = arith.mulf %764, %766 : vector<1x128xf32>
    %768 = arith.addf %721, %767 : vector<1x128xf32>
    %c15_328 = arith.constant 15 : index
    %c1_329 = arith.constant 1 : index
    %769 = memref.load %arg3[%c15_328, %c1_329] : memref<16x4xf32, #tpu.memory_space<smem>>
    %770 = vector.broadcast %769 : f32 to vector<1x128xf32>
    %771 = arith.mulf %764, %770 : vector<1x128xf32>
    %772 = arith.addf %725, %771 : vector<1x128xf32>
    %c15_330 = arith.constant 15 : index
    %c2_331 = arith.constant 2 : index
    %773 = memref.load %arg3[%c15_330, %c2_331] : memref<16x4xf32, #tpu.memory_space<smem>>
    %774 = vector.broadcast %773 : f32 to vector<1x128xf32>
    %775 = arith.mulf %764, %774 : vector<1x128xf32>
    %776 = arith.addf %729, %775 : vector<1x128xf32>
    %c15_332 = arith.constant 15 : index
    %c3_333 = arith.constant 3 : index
    %777 = memref.load %arg3[%c15_332, %c3_333] : memref<16x4xf32, #tpu.memory_space<smem>>
    %778 = vector.broadcast %777 : f32 to vector<1x128xf32>
    %779 = arith.mulf %764, %778 : vector<1x128xf32>
    %780 = arith.addf %733, %779 : vector<1x128xf32>
    %c0_334 = arith.constant 0 : index
    %781 = memref.load %arg4[%c0_334] : memref<4xf32, #tpu.memory_space<smem>>
    %782 = vector.broadcast %781 : f32 to vector<1x128xf32>
    %783 = arith.addf %768, %782 : vector<1x128xf32>
    %c0_335 = arith.constant 0 : index
    %c0_336 = arith.constant 0 : index
    %c0_337 = arith.constant 0 : index
    %784 = vector.load %arg6[%c0_335, %c0_336, %c0_337] : memref<4x1x128xf32, #tpu.memory_space<vmem>>, vector<1x1x128xf32>
    %785 = vector.shape_cast %784 : vector<1x1x128xf32> to vector<1x128xf32>
    %786 = vector.shape_cast %783 : vector<1x128xf32> to vector<1x1x128xf32>
    tpu.vector_store %arg6[%c0_335, %c0_336, %c0_337], %786 {strides = array<i32>} : memref<4x1x128xf32, #tpu.memory_space<vmem>>, vector<1x1x128xf32>,
    %c1_338 = arith.constant 1 : index
    %787 = memref.load %arg4[%c1_338] : memref<4xf32, #tpu.memory_space<smem>>
    %788 = vector.broadcast %787 : f32 to vector<1x128xf32>
    %789 = arith.addf %772, %788 : vector<1x128xf32>
    %c1_339 = arith.constant 1 : index
    %c0_340 = arith.constant 0 : index
    %c0_341 = arith.constant 0 : index
    %790 = vector.load %arg6[%c1_339, %c0_340, %c0_341] : memref<4x1x128xf32, #tpu.memory_space<vmem>>, vector<1x1x128xf32>
    %791 = vector.shape_cast %790 : vector<1x1x128xf32> to vector<1x128xf32>
    %792 = vector.shape_cast %789 : vector<1x128xf32> to vector<1x1x128xf32>
    tpu.vector_store %arg6[%c1_339, %c0_340, %c0_341], %792 {strides = array<i32>} : memref<4x1x128xf32, #tpu.memory_space<vmem>>, vector<1x1x128xf32>,
    %c2_342 = arith.constant 2 : index
    %793 = memref.load %arg4[%c2_342] : memref<4xf32, #tpu.memory_space<smem>>
    %794 = vector.broadcast %793 : f32 to vector<1x128xf32>
    %795 = arith.addf %776, %794 : vector<1x128xf32>
    %c2_343 = arith.constant 2 : index
    %c0_344 = arith.constant 0 : index
    %c0_345 = arith.constant 0 : index
    %796 = vector.load %arg6[%c2_343, %c0_344, %c0_345] : memref<4x1x128xf32, #tpu.memory_space<vmem>>, vector<1x1x128xf32>
    %797 = vector.shape_cast %796 : vector<1x1x128xf32> to vector<1x128xf32>
    %798 = vector.shape_cast %795 : vector<1x128xf32> to vector<1x1x128xf32>
    tpu.vector_store %arg6[%c2_343, %c0_344, %c0_345], %798 {strides = array<i32>} : memref<4x1x128xf32, #tpu.memory_space<vmem>>, vector<1x1x128xf32>,
    %c3_346 = arith.constant 3 : index
    %799 = memref.load %arg4[%c3_346] : memref<4xf32, #tpu.memory_space<smem>>
    %800 = vector.broadcast %799 : f32 to vector<1x128xf32>
    %801 = arith.addf %780, %800 : vector<1x128xf32>
    %c3_347 = arith.constant 3 : index
    %c0_348 = arith.constant 0 : index
    %c0_349 = arith.constant 0 : index
    %802 = vector.load %arg6[%c3_347, %c0_348, %c0_349] : memref<4x1x128xf32, #tpu.memory_space<vmem>>, vector<1x1x128xf32>
    %803 = vector.shape_cast %802 : vector<1x1x128xf32> to vector<1x128xf32>
    %804 = vector.shape_cast %801 : vector<1x128xf32> to vector<1x1x128xf32>
    tpu.vector_store %arg6[%c3_347, %c0_348, %c0_349], %804 {strides = array<i32>} : memref<4x1x128xf32, #tpu.memory_space<vmem>>, vector<1x1x128xf32>,
    return
  }
  func.func @transform_0(%arg0: i32) -> (i32, i32) {
    %c0_i32 = arith.constant 0 : i32
    %c0_i32_0 = arith.constant 0 : i32
    %c0_i32_1 = arith.constant 0 : i32
    return %c0_i32, %c0_i32_0 : i32, i32
  }
  func.func @transform_1(%arg0: i32) -> i32 {
    %c0_i32 = arith.constant 0 : i32
    %c0_i32_0 = arith.constant 0 : i32
    return %c0_i32 : i32
  }
  func.func @transform_2(%arg0: i32) -> (i32, i32) {
    %c0_i32 = arith.constant 0 : i32
    %c0_i32_0 = arith.constant 0 : i32
    %c0_i32_1 = arith.constant 0 : i32
    return %c0_i32, %c0_i32_0 : i32, i32
  }
  func.func @transform_3(%arg0: i32) -> i32 {
    %c0_i32 = arith.constant 0 : i32
    %c0_i32_0 = arith.constant 0 : i32
    return %c0_i32 : i32
  }
  func.func @transform_4(%arg0: i32) -> (i32, i32, i32) {
    %c0_i32 = arith.constant 0 : i32
    %c0_i32_0 = arith.constant 0 : i32
    %c0_i32_1 = arith.constant 0 : i32
    return %c0_i32, %arg0, %c0_i32_0 : i32, i32, i32
  }
  func.func @transform_5(%arg0: i32) -> (i32, i32, i32) {
    %c0_i32 = arith.constant 0 : i32
    %c0_i32_0 = arith.constant 0 : i32
    %c0_i32_1 = arith.constant 0 : i32
    return %c0_i32, %arg0, %c0_i32_0 : i32, i32, i32
  }
}

</mosaic_0001>

<llo_original>
// kernel: tpu_custom_call.1
$region0: #{tpu_custom_call.1}
  #allocation0 [shape = 'u32[]', space=smem, size = 0x4, offset = 0x4, fixed_abs, tag = 'smem constant byte address 0x4 - core index']
  #allocation1 [shape = 'u32[144,128]{1,0:T(1,128)}', space=vmem, size = 0x12000, scoped, tag = 'internal scratch']
  %s0 = inlined_call_operand.vmem [shape: f32[4,16], index: 0, kind: input, shape index: {}]
  %s1 = inlined_call_operand.vmem [shape: f32[16], index: 1, kind: input, shape index: {}]
  %s2 = inlined_call_operand.vmem [shape: f32[16,4], index: 2, kind: input, shape index: {}]
  %s3 = inlined_call_operand.vmem [shape: f32[4], index: 3, kind: input, shape index: {}]
  %s4 = inlined_call_operand.vmem [shape: f32[4,1,128], index: 4, kind: input, shape index: {}]
  %s5 = inlined_call_operand.hbm [shape: f32[4,1,128], index: 5, kind: output, shape index: {}]
  %s6 = sld [smem:[#allocation0]]
  $region46: #{tpu_custom_call.1} parent=0
    _
  %s8 = ssub.s32 1, %s6
  %s9 = scalar_select 0, %s8, %s6
  $region1: #{tpu_custom_call.1} parent=0
    #allocation2 [shape = 'u8[2048]{0}', space=smem, size = 0x800, scoped, tag = 'input window, operand 0, single buffered']
    #allocation3 [shape = 's32[1]{0}', space=sflag, size = 0x4, scoped, tag = 'scoped memory for tpu_custom_call.1']
    #allocation4 [shape = 's32[1]{0}', space=sflag, size = 0x4, scoped, tag = 'scoped memory for tpu_custom_call.1']
    #allocation5 [shape = 'u8[512]{0}', space=smem, size = 0x200, scoped, tag = 'input window, operand 1, single buffered']
    #allocation6 [shape = 's32[1]{0}', space=sflag, size = 0x4, scoped, tag = 'scoped memory for tpu_custom_call.1']
    #allocation7 [shape = 'u8[8192]{0}', space=smem, size = 0x2000, scoped, tag = 'input window, operand 2, single buffered']
    #allocation8 [shape = 'u8[512]{0}', space=smem, size = 0x200, scoped, tag = 'input window, operand 3, single buffered']
    #allocation9 [shape = 's32[1]{0}', space=sflag, size = 0x4, scoped, tag = 'scoped memory for tpu_custom_call.1']
    #allocation10 [shape = 'u8[2048]{0}', space=vmem, size = 0x800, scoped, tag = 'output window, operand 0, single buffered']
    %10 = vsyncpa [#allocation4], 0
    %11 = vsyncpa [#allocation6], 0
    %12 = vsyncpa [#allocation9], 0
    %13 = vsyncpa [#allocation3], 0
    // Predicated region
    $region2: #{tpu_custom_call.1} parent=1 // pred_check
      _
    $region3: #{tpu_custom_call.1} parent=1 // pred_check_branch
      %15 = sbr.rel (0) target = $region5
    $region4: #{tpu_custom_call.1} parent=1 // pred_region
      %s17 = ssub.s32 64, 64
      %18 = vsyncadd [#allocation4], %s17
      %s20 = sshll.u32 %s0, 4
      %s21 = int_to_ptr.vmem [resolvable:$true] %s20
      %23 = dma.vmem_to_smem %s21, 64, [#allocation2], [#allocation4]
    $region5: #{tpu_custom_call.1} parent=1 // pred_fallthru
      _
    // Predicated region
    $region6: #{tpu_custom_call.1} parent=1 // pred_check
      _
    $region7: #{tpu_custom_call.1} parent=1 // pred_check_branch
      %25 = sbr.rel (0) target = $region9
    $region8: #{tpu_custom_call.1} parent=1 // pred_region
      %s27 = ssub.s32 16, 16
      %28 = vsyncadd [#allocation6], %s27
      %s30 = sshll.u32 %s1, 4
      %s31 = int_to_ptr.vmem [resolvable:$true] %s30
      %33 = dma.vmem_to_smem %s31, 16, [#allocation5], [#allocation6]
    $region9: #{tpu_custom_call.1} parent=1 // pred_fallthru
      _
    // Predicated region
    $region10: #{tpu_custom_call.1} parent=1 // pred_check
      _
    $region11: #{tpu_custom_call.1} parent=1 // pred_check_branch
      %35 = sbr.rel (0) target = $region13
    $region12: #{tpu_custom_call.1} parent=1 // pred_region
      %s37 = ssub.s32 256, 256
      %38 = vsyncadd [#allocation6], %s37
      %s39 = sshll.u32 %s2, 4
      %s40 = int_to_ptr.vmem [resolvable:$true] %s39
      %45 = dma.vmem_to_smem %s40, 256, [#allocation7], [#allocation6], 128, 128, 8
    $region13: #{tpu_custom_call.1} parent=1 // pred_fallthru
      _
    // Predicated region
    $region14: #{tpu_custom_call.1} parent=1 // pred_check
      _
    $region15: #{tpu_custom_call.1} parent=1 // pred_check_branch
      %47 = sbr.rel (0) target = $region17
    $region16: #{tpu_custom_call.1} parent=1 // pred_region
      %s49 = ssub.s32 16, 16
      %50 = vsyncadd [#allocation9], %s49
      %s52 = sshll.u32 %s3, 4
      %s53 = int_to_ptr.vmem [resolvable:$true] %s52
      %55 = dma.vmem_to_smem %s53, 16, [#allocation8], [#allocation9]
    $region17: #{tpu_custom_call.1} parent=1 // pred_fallthru
      _
    // Predicated region
    $region18: #{tpu_custom_call.1} parent=1 // pred_check
      _
    $region19: #{tpu_custom_call.1} parent=1 // pred_check_branch
      %57 = sbr.rel (0) target = $region21
    $region20: #{tpu_custom_call.1} parent=1 // pred_region
      _
    $region21: #{tpu_custom_call.1} parent=1 // pred_fallthru
      _
    // Predicated region
    $region22: #{tpu_custom_call.1} parent=1 // pred_check
      _
    $region23: #{tpu_custom_call.1} parent=1 // pred_check_branch
      %59 = sbr.rel (0) target = $region25
    $region24: #{tpu_custom_call.1} parent=1 // pred_region
      %60 = dma.done [#allocation4], 64
    $region25: #{tpu_custom_call.1} parent=1 // pred_fallthru
      _
    // Predicated region
    $region26: #{tpu_custom_call.1} parent=1 // pred_check
      _
    $region27: #{tpu_custom_call.1} parent=1 // pred_check_branch
      %62 = sbr.rel (0) target = $region29
    $region28: #{tpu_custom_call.1} parent=1 // pred_region
      %63 = dma.done [#allocation6], 16
    $region29: #{tpu_custom_call.1} parent=1 // pred_fallthru
      _
    // Predicated region
    $region30: #{tpu_custom_call.1} parent=1 // pred_check
      _
    $region31: #{tpu_custom_call.1} parent=1 // pred_check_branch
      %65 = sbr.rel (0) target = $region33
    $region32: #{tpu_custom_call.1} parent=1 // pred_region
      %66 = dma.done [#allocation6], 256
    $region33: #{tpu_custom_call.1} parent=1 // pred_fallthru
      _
    // Predicated region
    $region34: #{tpu_custom_call.1} parent=1 // pred_check
      _
    $region35: #{tpu_custom_call.1} parent=1 // pred_check_branch
      %68 = sbr.rel (0) target = $region37
    $region36: #{tpu_custom_call.1} parent=1 // pred_region
      %69 = dma.done [#allocation9], 16
    $region37: #{tpu_custom_call.1} parent=1 // pred_fallthru
      _
    %70 = sfence
    %v71 = vld [vmem:[%s4] sm:$0x1]
    %s72 = scalar_lea.vmem %s4, 1
    %v73 = vld [vmem:[%s72] sm:$0x1]
    %s74 = scalar_lea.vmem %s4, 2
    %v75 = vld [vmem:[%s74] sm:$0x1]
    %s76 = scalar_lea.vmem %s4, 3
    %v77 = vld [vmem:[%s76] sm:$0x1]
    %v78 = vadd.f32 %v71, %v73
    %v79 = vadd.f32 %v78, %v75
    %v80 = vadd.f32 %v79, %v77
    %v81 = vmul.f32 %v80, 0.25
    %v82 = vsub.f32 %v71, %v81
    %v83 = vsub.f32 %v73, %v81
    %v84 = vsub.f32 %v75, %v81
    %v85 = vsub.f32 %v77, %v81
    %v86 = vmul.f32 %v82, %v82
    %v87 = vmul.f32 %v83, %v83
    %v88 = vadd.f32 %v86, %v87
    %v89 = vmul.f32 %v84, %v84
    %v90 = vadd.f32 %v88, %v89
    %v91 = vmul.f32 %v85, %v85
    %v92 = vadd.f32 %v90, %v91
    %v93 = vmul.f32 %v92, 0.25
    %v94 = vadd.f32 %v93, 1e-05
    %v95 = vrsqrt.pop %v94
    %v96 = vmul.f32 %v82, %v95
    %v97 = vmul.f32 %v83, %v95
    %v98 = vmul.f32 %v84, %v95
    %v99 = vmul.f32 %v85, %v95
    %s100 = sld [smem:[#allocation2]]
    %v101 = vstv %s100
    %v102 = vmul.f32 %v96, %v101
    %s103 = sld [smem:[#allocation2 + $0x80]]
    %v104 = vstv %s103
    %v105 = vmul.f32 %v97, %v104
    %v106 = vadd.f32 %v102, %v105
    %s107 = sld [smem:[#allocation2 + $0x100]]
    %v108 = vstv %s107
    %v109 = vmul.f32 %v98, %v108
    %v110 = vadd.f32 %v106, %v109
    %s111 = sld [smem:[#allocation2 + $0x180]]
    %v112 = vstv %s111
    %v113 = vmul.f32 %v99, %v112
    %v114 = vadd.f32 %v110, %v113
    %s115 = sld [smem:[#allocation5]]
    %v116 = vstv %s115
    %v117 = vadd.f32 %v114, %v116
    %v118 = vmul.f32 %v117, %v117
    %v119 = vmul.f32 %v117, %v118
    %v120 = vmul.f32 %v119, 0.044715
    %v121 = vadd.f32 %v117, %v120
    %v122 = vmul.f32 %v121, 0.7978846
    %v123 = vtanh.pop %v122
    %v124 = vadd.f32 %v123, 1.0
    %v125 = vmul.f32 %v124, 0.5
    %v126 = vmul.f32 %v117, %v125
    %s127 = sld [smem:[#allocation7]]
    %v128 = vstv %s127
    %v129 = vmul.f32 %v126, %v128
    %s130 = sld [smem:[#allocation7 + $0x1]]
    %v131 = vstv %s130
    %v132 = vmul.f32 %v126, %v131
    %s133 = sld [smem:[#allocation7 + $0x2]]
    %v134 = vstv %s133
    %v135 = vmul.f32 %v126, %v134
    %s136 = sld [smem:[#allocation7 + $0x3]]
    %v137 = vstv %s136
    %v138 = vmul.f32 %v126, %v137
    %s139 = sld [smem:[#allocation2 + $0x1]]
    %v140 = vstv %s139
    %v141 = vmul.f32 %v96, %v140
    %s142 = sld [smem:[#allocation2 + $0x81]]
    %v143 = vstv %s142
    %v144 = vmul.f32 %v97, %v143
    %v145 = vadd.f32 %v141, %v144
    %s146 = sld [smem:[#allocation2 + $0x101]]
    %v147 = vstv %s146
    %v148 = vmul.f32 %v98, %v147
    %v149 = vadd.f32 %v145, %v148
    %s150 = sld [smem:[#allocation2 + $0x181]]
    %v151 = vstv %s150
    %v152 = vmul.f32 %v99, %v151
    %v153 = vadd.f32 %v149, %v152
    %s154 = sld [smem:[#allocation5 + $0x1]]
    %v155 = vstv %s154
    %v156 = vadd.f32 %v153, %v155
    %v157 = vmul.f32 %v156, %v156
    %v158 = vmul.f32 %v156, %v157
    %v159 = vmul.f32 %v158, 0.044715
    %v160 = vadd.f32 %v156, %v159
    %v161 = vmul.f32 %v160, 0.7978846
    %v162 = vtanh.pop %v161
    %v163 = vadd.f32 %v162, 1.0
    %v164 = vmul.f32 %v163, 0.5
    %v165 = vmul.f32 %v156, %v164
    %s166 = sld [smem:[#allocation7 + $0x80]]
    %v167 = vstv %s166
    %v168 = vmul.f32 %v165, %v167
    %v169 = vadd.f32 %v129, %v168
    %s170 = sld [smem:[#allocation7 + $0x81]]
    %v171 = vstv %s170
    %v172 = vmul.f32 %v165, %v171
    %v173 = vadd.f32 %v132, %v172
    %s174 = sld [smem:[#allocation7 + $0x82]]
    %v175 = vstv %s174
    %v176 = vmul.f32 %v165, %v175
    %v177 = vadd.f32 %v135, %v176
    %s178 = sld [smem:[#allocation7 + $0x83]]
    %v179 = vstv %s178
    %v180 = vmul.f32 %v165, %v179
    %v181 = vadd.f32 %v138, %v180
    %s182 = sld [smem:[#allocation2 + $0x2]]
    %v183 = vstv %s182
    %v184 = vmul.f32 %v96, %v183
    %s185 = sld [smem:[#allocation2 + $0x82]]
    %v186 = vstv %s185
    %v187 = vmul.f32 %v97, %v186
    %v188 = vadd.f32 %v184, %v187
    %s189 = sld [smem:[#allocation2 + $0x102]]
    %v190 = vstv %s189
    %v191 = vmul.f32 %v98, %v190
    %v192 = vadd.f32 %v188, %v191
    %s193 = sld [smem:[#allocation2 + $0x182]]
    %v194 = vstv %s193
    %v195 = vmul.f32 %v99, %v194
    %v196 = vadd.f32 %v192, %v195
    %s197 = sld [smem:[#allocation5 + $0x2]]
    %v198 = vstv %s197
    %v199 = vadd.f32 %v196, %v198
    %v200 = vmul.f32 %v199, %v199
    %v201 = vmul.f32 %v199, %v200
    %v202 = vmul.f32 %v201, 0.044715
    %v203 = vadd.f32 %v199, %v202
    %v204 = vmul.f32 %v203, 0.7978846
    %v205 = vtanh.pop %v204
    %v206 = vadd.f32 %v205, 1.0
    %v207 = vmul.f32 %v206, 0.5
    %v208 = vmul.f32 %v199, %v207
    %s209 = sld [smem:[#allocation7 + $0x100]]
    %v210 = vstv %s209
    %v211 = vmul.f32 %v208, %v210
    %v212 = vadd.f32 %v169, %v211
    %s213 = sld [smem:[#allocation7 + $0x101]]
    %v214 = vstv %s213
    %v215 = vmul.f32 %v208, %v214
    %v216 = vadd.f32 %v173, %v215
    %s217 = sld [smem:[#allocation7 + $0x102]]
    %v218 = vstv %s217
    %v219 = vmul.f32 %v208, %v218
    %v220 = vadd.f32 %v177, %v219
    %s221 = sld [smem:[#allocation7 + $0x103]]
    %v222 = vstv %s221
    %v223 = vmul.f32 %v208, %v222
    %v224 = vadd.f32 %v181, %v223
    %s225 = sld [smem:[#allocation2 + $0x3]]
    %v226 = vstv %s225
    %v227 = vmul.f32 %v96, %v226
    %s228 = sld [smem:[#allocation2 + $0x83]]
    %v229 = vstv %s228
    %v230 = vmul.f32 %v97, %v229
    %v231 = vadd.f32 %v227, %v230
    %s232 = sld [smem:[#allocation2 + $0x103]]
    %v233 = vstv %s232
    %v234 = vmul.f32 %v98, %v233
    %v235 = vadd.f32 %v231, %v234
    %s236 = sld [smem:[#allocation2 + $0x183]]
    %v237 = vstv %s236
    %v238 = vmul.f32 %v99, %v237
    %v239 = vadd.f32 %v235, %v238
    %s240 = sld [smem:[#allocation5 + $0x3]]
    %v241 = vstv %s240
    %v242 = vadd.f32 %v239, %v241
    %v243 = vmul.f32 %v242, %v242
    %v244 = vmul.f32 %v242, %v243
    %v245 = vmul.f32 %v244, 0.044715
    %v246 = vadd.f32 %v242, %v245
    %v247 = vmul.f32 %v246, 0.7978846
    %v248 = vtanh.pop %v247
    %v249 = vadd.f32 %v248, 1.0
    %v250 = vmul.f32 %v249, 0.5
    %v251 = vmul.f32 %v242, %v250
    %s252 = sld [smem:[#allocation7 + $0x180]]
    %v253 = vstv %s252
    %v254 = vmul.f32 %v251, %v253
    %v255 = vadd.f32 %v212, %v254
    %s256 = sld [smem:[#allocation7 + $0x181]]
    %v257 = vstv %s256
    %v258 = vmul.f32 %v251, %v257
    %v259 = vadd.f32 %v216, %v258
    %s260 = sld [smem:[#allocation7 + $0x182]]
    %v261 = vstv %s260
    %v262 = vmul.f32 %v251, %v261
    %v263 = vadd.f32 %v220, %v262
    %s264 = sld [smem:[#allocation7 + $0x183]]
    %v265 = vstv %s264
    %v266 = vmul.f32 %v251, %v265
    %v267 = vadd.f32 %v224, %v266
    %s268 = sld [smem:[#allocation2 + $0x4]]
    %v269 = vstv %s268
    %v270 = vmul.f32 %v96, %v269
    %s271 = sld [smem:[#allocation2 + $0x84]]
    %v272 = vstv %s271
    %v273 = vmul.f32 %v97, %v272
    %v274 = vadd.f32 %v270, %v273
    %s275 = sld [smem:[#allocation2 + $0x104]]
    %v276 = vstv %s275
    %v277 = vmul.f32 %v98, %v276
    %v278 = vadd.f32 %v274, %v277
    %s279 = sld [smem:[#allocation2 + $0x184]]
    %v280 = vstv %s279
    %v281 = vmul.f32 %v99, %v280
    %v282 = vadd.f32 %v278, %v281
    %s283 = sld [smem:[#allocation5 + $0x4]]
    %v284 = vstv %s283
    %v285 = vadd.f32 %v282, %v284
    %v286 = vmul.f32 %v285, %v285
    %v287 = vmul.f32 %v285, %v286
    %v288 = vmul.f32 %v287, 0.044715
    %v289 = vadd.f32 %v285, %v288
    %v290 = vmul.f32 %v289, 0.7978846
    %v291 = vtanh.pop %v290
    %v292 = vadd.f32 %v291, 1.0
    %v293 = vmul.f32 %v292, 0.5
    %v294 = vmul.f32 %v285, %v293
    %s295 = sld [smem:[#allocation7 + $0x200]]
    %v296 = vstv %s295
    %v297 = vmul.f32 %v294, %v296
    %v298 = vadd.f32 %v255, %v297
    %s299 = sld [smem:[#allocation7 + $0x201]]
    %v300 = vstv %s299
    %v301 = vmul.f32 %v294, %v300
    %v302 = vadd.f32 %v259, %v301
    %s303 = sld [smem:[#allocation7 + $0x202]]
    %v304 = vstv %s303
    %v305 = vmul.f32 %v294, %v304
    %v306 = vadd.f32 %v263, %v305
    %s307 = sld [smem:[#allocation7 + $0x203]]
    %v308 = vstv %s307
    %v309 = vmul.f32 %v294, %v308
    %v310 = vadd.f32 %v267, %v309
    %s311 = sld [smem:[#allocation2 + $0x5]]
    %v312 = vstv %s311
    %v313 = vmul.f32 %v96, %v312
    %s314 = sld [smem:[#allocation2 + $0x85]]
    %v315 = vstv %s314
    %v316 = vmul.f32 %v97, %v315
    %v317 = vadd.f32 %v313, %v316
    %s318 = sld [smem:[#allocation2 + $0x105]]
    %v319 = vstv %s318
    %v320 = vmul.f32 %v98, %v319
    %v321 = vadd.f32 %v317, %v320
    %s322 = sld [smem:[#allocation2 + $0x185]]
    %v323 = vstv %s322
    %v324 = vmul.f32 %v99, %v323
    %v325 = vadd.f32 %v321, %v324
    %s326 = sld [smem:[#allocation5 + $0x5]]
    %v327 = vstv %s326
    %v328 = vadd.f32 %v325, %v327
    %v329 = vmul.f32 %v328, %v328
    %v330 = vmul.f32 %v328, %v329
    %v331 = vmul.f32 %v330, 0.044715
    %v332 = vadd.f32 %v328, %v331
    %v333 = vmul.f32 %v332, 0.7978846
    %v334 = vtanh.pop %v333
    %v335 = vadd.f32 %v334, 1.0
    %v336 = vmul.f32 %v335, 0.5
    %v337 = vmul.f32 %v328, %v336
    %s338 = sld [smem:[#allocation7 + $0x280]]
    %v339 = vstv %s338
    %v340 = vmul.f32 %v337, %v339
    %v341 = vadd.f32 %v298, %v340
    %s342 = sld [smem:[#allocation7 + $0x281]]
    %v343 = vstv %s342
    %v344 = vmul.f32 %v337, %v343
    %v345 = vadd.f32 %v302, %v344
    %s346 = sld [smem:[#allocation7 + $0x282]]
    %v347 = vstv %s346
    %v348 = vmul.f32 %v337, %v347
    %v349 = vadd.f32 %v306, %v348
    %s350 = sld [smem:[#allocation7 + $0x283]]
    %v351 = vstv %s350
    %v352 = vmul.f32 %v337, %v351
    %v353 = vadd.f32 %v310, %v352
    %s354 = sld [smem:[#allocation2 + $0x6]]
    %v355 = vstv %s354
    %v356 = vmul.f32 %v96, %v355
    %s357 = sld [smem:[#allocation2 + $0x86]]
    %v358 = vstv %s357
    %v359 = vmul.f32 %v97, %v358
    %v360 = vadd.f32 %v356, %v359
    %s361 = sld [smem:[#allocation2 + $0x106]]
    %v362 = vstv %s361
    %v363 = vmul.f32 %v98, %v362
    %v364 = vadd.f32 %v360, %v363
    %s365 = sld [smem:[#allocation2 + $0x186]]
    %v366 = vstv %s365
    %v367 = vmul.f32 %v99, %v366
    %v368 = vadd.f32 %v364, %v367
    %s369 = sld [smem:[#allocation5 + $0x6]]
    %v370 = vstv %s369
    %v371 = vadd.f32 %v368, %v370
    %v372 = vmul.f32 %v371, %v371
    %v373 = vmul.f32 %v371, %v372
    %v374 = vmul.f32 %v373, 0.044715
    %v375 = vadd.f32 %v371, %v374
    %v376 = vmul.f32 %v375, 0.7978846
    %v377 = vtanh.pop %v376
    %v378 = vadd.f32 %v377, 1.0
    %v379 = vmul.f32 %v378, 0.5
    %v380 = vmul.f32 %v371, %v379
    %s381 = sld [smem:[#allocation7 + $0x300]]
    %v382 = vstv %s381
    %v383 = vmul.f32 %v380, %v382
    %v384 = vadd.f32 %v341, %v383
    %s385 = sld [smem:[#allocation7 + $0x301]]
    %v386 = vstv %s385
    %v387 = vmul.f32 %v380, %v386
    %v388 = vadd.f32 %v345, %v387
    %s389 = sld [smem:[#allocation7 + $0x302]]
    %v390 = vstv %s389
    %v391 = vmul.f32 %v380, %v390
    %v392 = vadd.f32 %v349, %v391
    %s393 = sld [smem:[#allocation7 + $0x303]]
    %v394 = vstv %s393
    %v395 = vmul.f32 %v380, %v394
    %v396 = vadd.f32 %v353, %v395
    %s397 = sld [smem:[#allocation2 + $0x7]]
    %v398 = vstv %s397
    %v399 = vmul.f32 %v96, %v398
    %s400 = sld [smem:[#allocation2 + $0x87]]
    %v401 = vstv %s400
    %v402 = vmul.f32 %v97, %v401
    %v403 = vadd.f32 %v399, %v402
    %s404 = sld [smem:[#allocation2 + $0x107]]
    %v405 = vstv %s404
    %v406 = vmul.f32 %v98, %v405
    %v407 = vadd.f32 %v403, %v406
    %s408 = sld [smem:[#allocation2 + $0x187]]
    %v409 = vstv %s408
    %v410 = vmul.f32 %v99, %v409
    %v411 = vadd.f32 %v407, %v410
    %s412 = sld [smem:[#allocation5 + $0x7]]
    %v413 = vstv %s412
    %v414 = vadd.f32 %v411, %v413
    %v415 = vmul.f32 %v414, %v414
    %v416 = vmul.f32 %v414, %v415
    %v417 = vmul.f32 %v416, 0.044715
    %v418 = vadd.f32 %v414, %v417
    %v419 = vmul.f32 %v418, 0.7978846
    %v420 = vtanh.pop %v419
    %v421 = vadd.f32 %v420, 1.0
    %v422 = vmul.f32 %v421, 0.5
    %v423 = vmul.f32 %v414, %v422
    %s424 = sld [smem:[#allocation7 + $0x380]]
    %v425 = vstv %s424
    %v426 = vmul.f32 %v423, %v425
    %v427 = vadd.f32 %v384, %v426
    %s428 = sld [smem:[#allocation7 + $0x381]]
    %v429 = vstv %s428
    %v430 = vmul.f32 %v423, %v429
    %v431 = vadd.f32 %v388, %v430
    %s432 = sld [smem:[#allocation7 + $0x382]]
    %v433 = vstv %s432
    %v434 = vmul.f32 %v423, %v433
    %v435 = vadd.f32 %v392, %v434
    %s436 = sld [smem:[#allocation7 + $0x383]]
    %v437 = vstv %s436
    %v438 = vmul.f32 %v423, %v437
    %v439 = vadd.f32 %v396, %v438
    %s440 = sld [smem:[#allocation2 + $0x8]]
    %v441 = vstv %s440
    %v442 = vmul.f32 %v96, %v441
    %s443 = sld [smem:[#allocation2 + $0x88]]
    %v444 = vstv %s443
    %v445 = vmul.f32 %v97, %v444
    %v446 = vadd.f32 %v442, %v445
    %s447 = sld [smem:[#allocation2 + $0x108]]
    %v448 = vstv %s447
    %v449 = vmul.f32 %v98, %v448
    %v450 = vadd.f32 %v446, %v449
    %s451 = sld [smem:[#allocation2 + $0x188]]
    %v452 = vstv %s451
    %v453 = vmul.f32 %v99, %v452
    %v454 = vadd.f32 %v450, %v453
    %s455 = sld [smem:[#allocation5 + $0x8]]
    %v456 = vstv %s455
    %v457 = vadd.f32 %v454, %v456
    %v458 = vmul.f32 %v457, %v457
    %v459 = vmul.f32 %v457, %v458
    %v460 = vmul.f32 %v459, 0.044715
    %v461 = vadd.f32 %v457, %v460
    %v462 = vmul.f32 %v461, 0.7978846
    %v463 = vtanh.pop %v462
    %v464 = vadd.f32 %v463, 1.0
    %v465 = vmul.f32 %v464, 0.5
    %v466 = vmul.f32 %v457, %v465
    %s467 = sld [smem:[#allocation7 + $0x400]]
    %v468 = vstv %s467
    %v469 = vmul.f32 %v466, %v468
    %v470 = vadd.f32 %v427, %v469
    %s471 = sld [smem:[#allocation7 + $0x401]]
    %v472 = vstv %s471
    %v473 = vmul.f32 %v466, %v472
    %v474 = vadd.f32 %v431, %v473
    %s475 = sld [smem:[#allocation7 + $0x402]]
    %v476 = vstv %s475
    %v477 = vmul.f32 %v466, %v476
    %v478 = vadd.f32 %v435, %v477
    %s479 = sld [smem:[#allocation7 + $0x403]]
    %v480 = vstv %s479
    %v481 = vmul.f32 %v466, %v480
    %v482 = vadd.f32 %v439, %v481
    %s483 = sld [smem:[#allocation2 + $0x9]]
    %v484 = vstv %s483
    %v485 = vmul.f32 %v96, %v484
    %s486 = sld [smem:[#allocation2 + $0x89]]
    %v487 = vstv %s486
    %v488 = vmul.f32 %v97, %v487
    %v489 = vadd.f32 %v485, %v488
    %s490 = sld [smem:[#allocation2 + $0x109]]
    %v491 = vstv %s490
    %v492 = vmul.f32 %v98, %v491
    %v493 = vadd.f32 %v489, %v492
    %s494 = sld [smem:[#allocation2 + $0x189]]
    %v495 = vstv %s494
    %v496 = vmul.f32 %v99, %v495
    %v497 = vadd.f32 %v493, %v496
    %s498 = sld [smem:[#allocation5 + $0x9]]
    %v499 = vstv %s498
    %v500 = vadd.f32 %v497, %v499
    %v501 = vmul.f32 %v500, %v500
    %v502 = vmul.f32 %v500, %v501
    %v503 = vmul.f32 %v502, 0.044715
    %v504 = vadd.f32 %v500, %v503
    %v505 = vmul.f32 %v504, 0.7978846
    %v506 = vtanh.pop %v505
    %v507 = vadd.f32 %v506, 1.0
    %v508 = vmul.f32 %v507, 0.5
    %v509 = vmul.f32 %v500, %v508
    %s510 = sld [smem:[#allocation7 + $0x480]]
    %v511 = vstv %s510
    %v512 = vmul.f32 %v509, %v511
    %v513 = vadd.f32 %v470, %v512
    %s514 = sld [smem:[#allocation7 + $0x481]]
    %v515 = vstv %s514
    %v516 = vmul.f32 %v509, %v515
    %v517 = vadd.f32 %v474, %v516
    %s518 = sld [smem:[#allocation7 + $0x482]]
    %v519 = vstv %s518
    %v520 = vmul.f32 %v509, %v519
    %v521 = vadd.f32 %v478, %v520
    %s522 = sld [smem:[#allocation7 + $0x483]]
    %v523 = vstv %s522
    %v524 = vmul.f32 %v509, %v523
    %v525 = vadd.f32 %v482, %v524
    %s526 = sld [smem:[#allocation2 + $0xa]]
    %v527 = vstv %s526
    %v528 = vmul.f32 %v96, %v527
    %s529 = sld [smem:[#allocation2 + $0x8a]]
    %v530 = vstv %s529
    %v531 = vmul.f32 %v97, %v530
    %v532 = vadd.f32 %v528, %v531
    %s533 = sld [smem:[#allocation2 + $0x10a]]
    %v534 = vstv %s533
    %v535 = vmul.f32 %v98, %v534
    %v536 = vadd.f32 %v532, %v535
    %s537 = sld [smem:[#allocation2 + $0x18a]]
    %v538 = vstv %s537
    %v539 = vmul.f32 %v99, %v538
    %v540 = vadd.f32 %v536, %v539
    %s541 = sld [smem:[#allocation5 + $0xa]]
    %v542 = vstv %s541
    %v543 = vadd.f32 %v540, %v542
    %v544 = vmul.f32 %v543, %v543
    %v545 = vmul.f32 %v543, %v544
    %v546 = vmul.f32 %v545, 0.044715
    %v547 = vadd.f32 %v543, %v546
    %v548 = vmul.f32 %v547, 0.7978846
    %v549 = vtanh.pop %v548
    %v550 = vadd.f32 %v549, 1.0
    %v551 = vmul.f32 %v550, 0.5
    %v552 = vmul.f32 %v543, %v551
    %s553 = sld [smem:[#allocation7 + $0x500]]
    %v554 = vstv %s553
    %v555 = vmul.f32 %v552, %v554
    %v556 = vadd.f32 %v513, %v555
    %s557 = sld [smem:[#allocation7 + $0x501]]
    %v558 = vstv %s557
    %v559 = vmul.f32 %v552, %v558
    %v560 = vadd.f32 %v517, %v559
    %s561 = sld [smem:[#allocation7 + $0x502]]
    %v562 = vstv %s561
    %v563 = vmul.f32 %v552, %v562
    %v564 = vadd.f32 %v521, %v563
    %s565 = sld [smem:[#allocation7 + $0x503]]
    %v566 = vstv %s565
    %v567 = vmul.f32 %v552, %v566
    %v568 = vadd.f32 %v525, %v567
    %s569 = sld [smem:[#allocation2 + $0xb]]
    %v570 = vstv %s569
    %v571 = vmul.f32 %v96, %v570
    %s572 = sld [smem:[#allocation2 + $0x8b]]
    %v573 = vstv %s572
    %v574 = vmul.f32 %v97, %v573
    %v575 = vadd.f32 %v571, %v574
    %s576 = sld [smem:[#allocation2 + $0x10b]]
    %v577 = vstv %s576
    %v578 = vmul.f32 %v98, %v577
    %v579 = vadd.f32 %v575, %v578
    %s580 = sld [smem:[#allocation2 + $0x18b]]
    %v581 = vstv %s580
    %v582 = vmul.f32 %v99, %v581
    %v583 = vadd.f32 %v579, %v582
    %s584 = sld [smem:[#allocation5 + $0xb]]
    %v585 = vstv %s584
    %v586 = vadd.f32 %v583, %v585
    %v587 = vmul.f32 %v586, %v586
    %v588 = vmul.f32 %v586, %v587
    %v589 = vmul.f32 %v588, 0.044715
    %v590 = vadd.f32 %v586, %v589
    %v591 = vmul.f32 %v590, 0.7978846
    %v592 = vtanh.pop %v591
    %v593 = vadd.f32 %v592, 1.0
    %v594 = vmul.f32 %v593, 0.5
    %v595 = vmul.f32 %v586, %v594
    %s596 = sld [smem:[#allocation7 + $0x580]]
    %v597 = vstv %s596
    %v598 = vmul.f32 %v595, %v597
    %v599 = vadd.f32 %v556, %v598
    %s600 = sld [smem:[#allocation7 + $0x581]]
    %v601 = vstv %s600
    %v602 = vmul.f32 %v595, %v601
    %v603 = vadd.f32 %v560, %v602
    %s604 = sld [smem:[#allocation7 + $0x582]]
    %v605 = vstv %s604
    %v606 = vmul.f32 %v595, %v605
    %v607 = vadd.f32 %v564, %v606
    %s608 = sld [smem:[#allocation7 + $0x583]]
    %v609 = vstv %s608
    %v610 = vmul.f32 %v595, %v609
    %v611 = vadd.f32 %v568, %v610
    %s612 = sld [smem:[#allocation2 + $0xc]]
    %v613 = vstv %s612
    %v614 = vmul.f32 %v96, %v613
    %s615 = sld [smem:[#allocation2 + $0x8c]]
    %v616 = vstv %s615
    %v617 = vmul.f32 %v97, %v616
    %v618 = vadd.f32 %v614, %v617
    %s619 = sld [smem:[#allocation2 + $0x10c]]
    %v620 = vstv %s619
    %v621 = vmul.f32 %v98, %v620
    %v622 = vadd.f32 %v618, %v621
    %s623 = sld [smem:[#allocation2 + $0x18c]]
    %v624 = vstv %s623
    %v625 = vmul.f32 %v99, %v624
    %v626 = vadd.f32 %v622, %v625
    %s627 = sld [smem:[#allocation5 + $0xc]]
    %v628 = vstv %s627
    %v629 = vadd.f32 %v626, %v628
    %v630 = vmul.f32 %v629, %v629
    %v631 = vmul.f32 %v629, %v630
    %v632 = vmul.f32 %v631, 0.044715
    %v633 = vadd.f32 %v629, %v632
    %v634 = vmul.f32 %v633, 0.7978846
    %v635 = vtanh.pop %v634
    %v636 = vadd.f32 %v635, 1.0
    %v637 = vmul.f32 %v636, 0.5
    %v638 = vmul.f32 %v629, %v637
    %s639 = sld [smem:[#allocation7 + $0x600]]
    %v640 = vstv %s639
    %v641 = vmul.f32 %v638, %v640
    %v642 = vadd.f32 %v599, %v641
    %s643 = sld [smem:[#allocation7 + $0x601]]
    %v644 = vstv %s643
    %v645 = vmul.f32 %v638, %v644
    %v646 = vadd.f32 %v603, %v645
    %s647 = sld [smem:[#allocation7 + $0x602]]
    %v648 = vstv %s647
    %v649 = vmul.f32 %v638, %v648
    %v650 = vadd.f32 %v607, %v649
    %s651 = sld [smem:[#allocation7 + $0x603]]
    %v652 = vstv %s651
    %v653 = vmul.f32 %v638, %v652
    %v654 = vadd.f32 %v611, %v653
    %s655 = sld [smem:[#allocation2 + $0xd]]
    %v656 = vstv %s655
    %v657 = vmul.f32 %v96, %v656
    %s658 = sld [smem:[#allocation2 + $0x8d]]
    %v659 = vstv %s658
    %v660 = vmul.f32 %v97, %v659
    %v661 = vadd.f32 %v657, %v660
    %s662 = sld [smem:[#allocation2 + $0x10d]]
    %v663 = vstv %s662
    %v664 = vmul.f32 %v98, %v663
    %v665 = vadd.f32 %v661, %v664
    %s666 = sld [smem:[#allocation2 + $0x18d]]
    %v667 = vstv %s666
    %v668 = vmul.f32 %v99, %v667
    %v669 = vadd.f32 %v665, %v668
    %s670 = sld [smem:[#allocation5 + $0xd]]
    %v671 = vstv %s670
    %v672 = vadd.f32 %v669, %v671
    %v673 = vmul.f32 %v672, %v672
    %v674 = vmul.f32 %v672, %v673
    %v675 = vmul.f32 %v674, 0.044715
    %v676 = vadd.f32 %v672, %v675
    %v677 = vmul.f32 %v676, 0.7978846
    %v678 = vtanh.pop %v677
    %v679 = vadd.f32 %v678, 1.0
    %v680 = vmul.f32 %v679, 0.5
    %v681 = vmul.f32 %v672, %v680
    %s682 = sld [smem:[#allocation7 + $0x680]]
    %v683 = vstv %s682
    %v684 = vmul.f32 %v681, %v683
    %v685 = vadd.f32 %v642, %v684
    %s686 = sld [smem:[#allocation7 + $0x681]]
    %v687 = vstv %s686
    %v688 = vmul.f32 %v681, %v687
    %v689 = vadd.f32 %v646, %v688
    %s690 = sld [smem:[#allocation7 + $0x682]]
    %v691 = vstv %s690
    %v692 = vmul.f32 %v681, %v691
    %v693 = vadd.f32 %v650, %v692
    %s694 = sld [smem:[#allocation7 + $0x683]]
    %v695 = vstv %s694
    %v696 = vmul.f32 %v681, %v695
    %v697 = vadd.f32 %v654, %v696
    %s698 = sld [smem:[#allocation2 + $0xe]]
    %v699 = vstv %s698
    %v700 = vmul.f32 %v96, %v699
    %s701 = sld [smem:[#allocation2 + $0x8e]]
    %v702 = vstv %s701
    %v703 = vmul.f32 %v97, %v702
    %v704 = vadd.f32 %v700, %v703
    %s705 = sld [smem:[#allocation2 + $0x10e]]
    %v706 = vstv %s705
    %v707 = vmul.f32 %v98, %v706
    %v708 = vadd.f32 %v704, %v707
    %s709 = sld [smem:[#allocation2 + $0x18e]]
    %v710 = vstv %s709
    %v711 = vmul.f32 %v99, %v710
    %v712 = vadd.f32 %v708, %v711
    %s713 = sld [smem:[#allocation5 + $0xe]]
    %v714 = vstv %s713
    %v715 = vadd.f32 %v712, %v714
    %v716 = vmul.f32 %v715, %v715
    %v717 = vmul.f32 %v715, %v716
    %v718 = vmul.f32 %v717, 0.044715
    %v719 = vadd.f32 %v715, %v718
    %v720 = vmul.f32 %v719, 0.7978846
    %v721 = vtanh.pop %v720
    %v722 = vadd.f32 %v721, 1.0
    %v723 = vmul.f32 %v722, 0.5
    %v724 = vmul.f32 %v715, %v723
    %s725 = sld [smem:[#allocation7 + $0x700]]
    %v726 = vstv %s725
    %v727 = vmul.f32 %v724, %v726
    %v728 = vadd.f32 %v685, %v727
    %s729 = sld [smem:[#allocation7 + $0x701]]
    %v730 = vstv %s729
    %v731 = vmul.f32 %v724, %v730
    %v732 = vadd.f32 %v689, %v731
    %s733 = sld [smem:[#allocation7 + $0x702]]
    %v734 = vstv %s733
    %v735 = vmul.f32 %v724, %v734
    %v736 = vadd.f32 %v693, %v735
    %s737 = sld [smem:[#allocation7 + $0x703]]
    %v738 = vstv %s737
    %v739 = vmul.f32 %v724, %v738
    %v740 = vadd.f32 %v697, %v739
    %s741 = sld [smem:[#allocation2 + $0xf]]
    %v742 = vstv %s741
    %v743 = vmul.f32 %v96, %v742
    %s744 = sld [smem:[#allocation2 + $0x8f]]
    %v745 = vstv %s744
    %v746 = vmul.f32 %v97, %v745
    %v747 = vadd.f32 %v743, %v746
    %s748 = sld [smem:[#allocation2 + $0x10f]]
    %v749 = vstv %s748
    %v750 = vmul.f32 %v98, %v749
    %v751 = vadd.f32 %v747, %v750
    %s752 = sld [smem:[#allocation2 + $0x18f]]
    %v753 = vstv %s752
    %v754 = vmul.f32 %v99, %v753
    %v755 = vadd.f32 %v751, %v754
    %s756 = sld [smem:[#allocation5 + $0xf]]
    %v757 = vstv %s756
    %v758 = vadd.f32 %v755, %v757
    %v759 = vmul.f32 %v758, %v758
    %v760 = vmul.f32 %v758, %v759
    %v761 = vmul.f32 %v760, 0.044715
    %v762 = vadd.f32 %v758, %v761
    %v763 = vmul.f32 %v762, 0.7978846
    %v764 = vtanh.pop %v763
    %v765 = vadd.f32 %v764, 1.0
    %v766 = vmul.f32 %v765, 0.5
    %v767 = vmul.f32 %v758, %v766
    %s768 = sld [smem:[#allocation7 + $0x780]]
    %v769 = vstv %s768
    %v770 = vmul.f32 %v767, %v769
    %v771 = vadd.f32 %v728, %v770
    %s772 = sld [smem:[#allocation7 + $0x781]]
    %v773 = vstv %s772
    %v774 = vmul.f32 %v767, %v773
    %v775 = vadd.f32 %v732, %v774
    %s776 = sld [smem:[#allocation7 + $0x782]]
    %v777 = vstv %s776
    %v778 = vmul.f32 %v767, %v777
    %v779 = vadd.f32 %v736, %v778
    %s780 = sld [smem:[#allocation7 + $0x783]]
    %v781 = vstv %s780
    %v782 = vmul.f32 %v767, %v781
    %v783 = vadd.f32 %v740, %v782
    %s784 = sld [smem:[#allocation8]]
    %v785 = vstv %s784
    %v786 = vadd.f32 %v771, %v785
    %787 = vst [vmem:[#allocation10] sm:$0x1] %v786
    %s788 = sld [smem:[#allocation8 + $0x1]]
    %v789 = vstv %s788
    %v790 = vadd.f32 %v775, %v789
    %s791 = scalar_lea.vmem [#allocation10], 1
    %792 = vst [vmem:[%s791] sm:$0x1] %v790
    %s793 = sld [smem:[#allocation8 + $0x2]]
    %v794 = vstv %s793
    %v795 = vadd.f32 %v779, %v794
    %s796 = scalar_lea.vmem [#allocation10], 2
    %797 = vst [vmem:[%s796] sm:$0x1] %v795
    %s798 = sld [smem:[#allocation8 + $0x3]]
    %v799 = vstv %s798
    %v800 = vadd.f32 %v783, %v799
    %s801 = scalar_lea.vmem [#allocation10], 3
    %802 = vst [vmem:[%s801] sm:$0x1] %v800
    // Predicated region
    $region38: #{tpu_custom_call.1} parent=1 // pred_check
      _
    $region39: #{tpu_custom_call.1} parent=1 // pred_check_branch
      %804 = sbr.rel (0) target = $region41
    $region40: #{tpu_custom_call.1} parent=1 // pred_region
      %s806 = ssub.s32 64, 64
      %807 = vsyncadd [#allocation3], %s806
      %s808 = sshll.u32 [#allocation10], 4
      %s809 = int_to_ptr.vmem [resolvable:$true] %s808
      %814 = dma.vmem_to_hbm [thread:$0]  %s809, 64, %s5, [#allocation3], 16, 16, 1
    $region41: #{tpu_custom_call.1} parent=1 // pred_fallthru
      _
    // Predicated region
    $region42: #{tpu_custom_call.1} parent=1 // pred_check
      _
    $region43: #{tpu_custom_call.1} parent=1 // pred_check_branch
      %816 = sbr.rel (0) target = $region45
    $region44: #{tpu_custom_call.1} parent=1 // pred_region
      %817 = dma.done [#allocation3], 64
    $region45: #{tpu_custom_call.1} parent=1 // pred_fallthru
      _
    %818 = vsyncpa [#allocation3], 1
    %819 = vsyncpa [#allocation4], 1
    %820 = vsyncpa [#allocation6], 1
    %821 = vsyncpa [#allocation9], 1

</llo_original>
